<compile_context>
chip_gen: v7x
topology: tpu7x:2x2x1
jax: 0.10.0
libtpu: 0.0.40
codegen_flags: <defaults>
</compile_context>

<pallas_src>
import functools
import re

import jax
import jax.numpy as jnp
from jax.experimental import pallas as pl
from jax.experimental.pallas import tpu as pltpu


def _round_up(x, m):
    return ((x + m - 1) // m) * m


def _tpu_generation():
    """Best-effort TPU generation (5, 6, 7, ...) from device_kind; 0 if unknown."""
    try:
        kind = jax.devices()[0].device_kind.lower()
    except Exception:
        return 0
    m = re.search(r"(\d+)", kind)
    return int(m.group(1)) if m else 0


def _clamp_vmem(nbytes, gen):
    cap = (48 << 20) if gen >= 7 else (100 << 20)   # leave headroom per generation
    return int(min(max(nbytes, 4 << 20), cap))


# ----------------------------------------------------------------------------
# Stage 1: conv stem as a flattened MXU matmul + SiLU + partial spatial pooling
# ----------------------------------------------------------------------------
def _conv_pool_kernel(patches_ref, wconv_ref, bconv_ref, psum_ref, *, compute_dtype):
    """Grid (b_tile, p_shard, k_step): one patch tile -> one bf16 MXU matmul with
    f32 accumulation, bias + SiLU (bf16 on v6e/v7x, f32 on v5e), partial pooled
    sum accumulated directly into the resident f32 output block."""
    kstep = pl.program_id(2)

    @pl.when(kstep == 0)
    def _():
        psum_ref[...] = jnp.zeros_like(psum_ref)

    bt, pt, ck = patches_ref.shape

    # Conv stem as ONE flattened bf16 matmul, f32 accumulation.
    lhs = patches_ref[...].reshape(bt * pt, ck)                       # bf16
    feats = jnp.dot(lhs, wconv_ref[...],
                    preferred_element_type=jnp.float32)               # (bt*pt, F) f32

    # Elementwise bias + SiLU in the per-generation compute dtype.
    feats = feats.astype(compute_dtype) + bconv_ref[...].astype(compute_dtype)
    feats = feats * jax.nn.sigmoid(feats)                             # SiLU

    # Pool in f32 (accumulation accuracy preserved).  No per-step pad masking:
    # padded rows contribute exactly silu(bconv) and are corrected in stage 2.
    feats = feats.astype(jnp.float32).reshape(bt, pt, -1)
    psum_ref[0] += jnp.sum(feats, axis=1)                             # (bt, F) f32


# ----------------------------------------------------------------------------
# Stage 2: shard combine + pad correction + mean + vision_proj + RMSNorm
# ----------------------------------------------------------------------------
def _epilogue_kernel(psum_ref, bconv_ref, wproj_ref, bproj_ref, gamma_ref, out_ref,
                     *, p_true, n_pad_rows, eps, compute_dtype):
    acc = jnp.sum(psum_ref[...], axis=0)                              # (bt, F) f32

    # Exact correction for zero-padded patch rows: each contributed silu(bconv)
    # computed along the SAME dtype path as stage 1.
    pad_feat = bconv_ref[...].astype(compute_dtype)
    pad_feat = (pad_feat * jax.nn.sigmoid(pad_feat)).astype(jnp.float32)   # (1, F)
    pooled = (acc - n_pad_rows * pad_feat) * (1.0 / p_true)           # true-P mean

    # vision_proj: bf16 resident weight, f32 accumulation.
    proj = jnp.dot(pooled.astype(wproj_ref.dtype), wproj_ref[...],
                   preferred_element_type=jnp.float32)
    proj = proj + bproj_ref[...]

    # RMSNorm.  TODO(synk): eps hard-set to 1e-6; match the module's RMSNorm eps.
    ms = jnp.mean(proj * proj, axis=-1, keepdims=True)
    out_ref[...] = (proj * jax.lax.rsqrt(ms + eps) * gamma_ref[...]).astype(out_ref.dtype)


# ----------------------------------------------------------------------------
# Wrapper: im2col glue + two pallas_calls
# ----------------------------------------------------------------------------
def multimodal_encoder_forward(images_nchw, params, *, eps=1e-6):
    """Fused encoder forward. images_nchw: (B, C, H, W) float32."""
    k, stride, pad = 3, 2, 1
    B, C, H, W = images_nchw.shape

    gen = _tpu_generation()
    # bf16 elementwise only on bf16-capable VPU/EUP (v6e / v7x); f32 on v5e.
    compute_dtype = jnp.bfloat16 if gen >= 6 else jnp.float32

    # ---- plain-JAX glue: NCHW -> NHWC, im2col patch extraction -------------
    # TODO(synk): fuse im2col into stage 1 at real scale (9x HBM read amplification
    #   here); negligible at toy shapes.
    x = jnp.transpose(images_nchw, (0, 2, 3, 1))                      # (B, H, W, C)
    xp = jnp.pad(x, ((0, 0), (pad, pad), (pad, pad), (0, 0)))
    Ho = (H + 2 * pad - k) // stride + 1
    Wo = (W + 2 * pad - k) // stride + 1
    windows = []
    for i in range(k):
        for j in range(k):
            windows.append(xp[:, i:i + stride * Ho:stride,
                               j:j + stride * Wo:stride, :])          # (B, Ho, Wo, C)
    P = Ho * Wo
    CK = k * k * C
    patches = jnp.stack(windows, axis=3).reshape(B, P, CK)            # (kh, kw, C) order

    # ---- parameters ---------------------------------------------------------
    wconv2d = params["wconv"]                                         # (F, C, k, k)
    Fdim = wconv2d.shape[0]
    CK_pad = _round_up(CK, 8)                                         # 27 -> 32
    wconv_mat = jnp.transpose(wconv2d, (2, 3, 1, 0)).reshape(CK, Fdim)
    wconv_mat = jnp.pad(wconv_mat, ((0, CK_pad - CK), (0, 0))).astype(jnp.bfloat16)

    bconv = params["bconv"].reshape(1, Fdim).astype(jnp.float32)
    wproj = params["wproj"].astype(jnp.bfloat16)                      # (F, D) bf16 resident
    D = wproj.shape[1]
    bproj = params["bproj"].reshape(1, D).astype(jnp.float32)
    gamma = params["gamma"].reshape(1, D).astype(jnp.float32)

    # ---- tiling -------------------------------------------------------------
    B_TILE = min(128, _round_up(B, 8))
    B_pad = _round_up(max(B, B_TILE), B_TILE)
    n_b_tiles = B_pad // B_TILE
    # v7x has 2 TensorCores: guarantee >= 2 programs on a parallel axis by splitting
    # the spatial dimension into 2 shards when there is only one batch tile.
    n_p_shards = 2 if n_b_tiles < 2 else 1

    # P_TILE sized so the live f32 feats tile stays a few MiB under the VMEM budget.
    feats_budget = (6 << 20) if gen >= 7 else (8 << 20)
    p_tile_max = max(8, (feats_budget // (B_TILE * Fdim * 4)) // 8 * 8)
    p_shard = _round_up(-(-P // n_p_shards), 8)
    P_TILE = min(p_tile_max, p_shard)
    p_shard = _round_up(p_shard, P_TILE)
    k_steps = p_shard // P_TILE
    P_pad = n_p_shards * p_shard
    n_pad_rows = P_pad - P

    # TODO(synk): patch block last dim is CK_pad=32 (< 128 lanes); the real fix is
    #   the in-kernel im2col fusion above (no patches array at all).
    patches = jnp.pad(patches, ((0, B_pad - B), (0, P_pad - P),
                                (0, CK_pad - CK))).astype(jnp.bfloat16)

    # ---- stage 1: conv + SiLU + partial pool --------------------------------
    vmem1 = (2 * B_TILE * P_TILE * CK_pad * 2      # patch tiles (bf16, double-buffered)
             + 2 * CK_pad * Fdim * 2               # resident conv weight (bf16)
             + 2 * Fdim * 4                        # resident conv bias (f32)
             + 2 * B_TILE * Fdim * 4               # partial-pool output block (f32)
             + B_TILE * P_TILE * Fdim * 6          # live feats (f32 + compute-dtype copy)
             + (2 << 20))                          # headroom
    psum = pl.pallas_call(
        functools.partial(_conv_pool_kernel, compute_dtype=compute_dtype),
        out_shape=jax.ShapeDtypeStruct((n_p_shards, B_pad, Fdim), jnp.float32),
        grid=(n_b_tiles, n_p_shards, k_steps),
        in_specs=[
            pl.BlockSpec((B_TILE, P_TILE, CK_pad),
                         lambda b, s, kk, _K=k_steps: (b, s * _K + kk, 0)),
            pl.BlockSpec((CK_pad, Fdim), lambda b, s, kk: (0, 0)),    # resident weight
            pl.BlockSpec((1, Fdim), lambda b, s, kk: (0, 0)),         # resident bias
        ],
        out_specs=pl.BlockSpec((1, B_TILE, Fdim), lambda b, s, kk: (s, b, 0)),
        compiler_params=pltpu.CompilerParams(
            dimension_semantics=("parallel", "parallel", "arbitrary"),
            vmem_limit_bytes=_clamp_vmem(vmem1, gen)),
    )(patches, wconv_mat, bconv)

    # ---- stage 2: combine shards + pad correction + mean + proj + RMSNorm ----
    vmem2 = (2 * n_p_shards * B_TILE * Fdim * 4
             + 2 * Fdim * 4
             + 2 * Fdim * D * 2
             + 2 * 2 * D * 4
             + 2 * B_TILE * D * 4
             + (2 << 20))
    out = pl.pallas_call(
        functools.partial(_epilogue_kernel, p_true=float(P),
                          n_pad_rows=float(n_pad_rows), eps=eps,
                          compute_dtype=compute_dtype),
        out_shape=jax.ShapeDtypeStruct((B_pad, D), jnp.float32),
        grid=(n_b_tiles,),
        in_specs=[
            pl.BlockSpec((n_p_shards, B_TILE, Fdim), lambda b: (0, b, 0)),
            pl.BlockSpec((1, Fdim), lambda b: (0, 0)),
            pl.BlockSpec((Fdim, D), lambda b: (0, 0)),                # resident proj W (bf16)
            pl.BlockSpec((1, D), lambda b: (0, 0)),
            pl.BlockSpec((1, D), lambda b: (0, 0)),
        ],
        out_specs=pl.BlockSpec((B_TILE, D), lambda b: (b, 0)),        # lane-dense output
        compiler_params=pltpu.CompilerParams(
            dimension_semantics=("parallel",),
            vmem_limit_bytes=_clamp_vmem(vmem2, gen)),
    )(psum, bconv, wproj, bproj, gamma)

    return out[:B]


# ----------------------------------------------------------------------------
# Pure-JAX f32 reference (same math) for a sanity check
# ----------------------------------------------------------------------------
def _reference(images_nchw, params, eps=1e-6):
    k, stride, pad = 3, 2, 1
    y = jax.lax.conv_general_dilated(
        images_nchw, params["wconv"], window_strides=(stride, stride),
        padding=((pad, pad), (pad, pad)),
        dimension_numbers=("NCHW", "OIHW", "NCHW"))
    y = y + params["bconv"][None, :, None, None]
    y = y * jax.nn.sigmoid(y)                                         # SiLU
    pooled = y.reshape(y.shape[0], y.shape[1], -1).mean(axis=2)
    proj = pooled @ params["wproj"] + params["bproj"]
    ms = jnp.mean(proj * proj, axis=-1, keepdims=True)
    return proj * jax.lax.rsqrt(ms + eps) * params["gamma"]


if __name__ == "__main__":
    # Small shapes consistent with the module:
    #   images: (B=2, C=3, H=18, W=18) -> conv stem -> P = 81 spatial positions
    #   backbone feature dim F = 128 (stand-in for EfficientNet's 1280)
    #   image_dim D = 128 (stand-in for 2048)
    # P = 81 deliberately exercises the spatial padding + epilogue-correction path.
    B, C, H, W = 2, 3, 18, 18
    F, D = 128, 128

    key = jax.random.PRNGKey(0)
    k_img, k_wc, k_bc, k_wp, k_bp = jax.random.split(key, 5)

    images = jax.random.normal(k_img, (B, C, H, W), dtype=jnp.float32)
    params = {
        "wconv": 0.1 * jax.random.normal(k_wc, (F, C, 3, 3), dtype=jnp.float32),
        "bconv": 0.01 * jax.random.normal(k_bc, (F,), dtype=jnp.float32),
        "wproj": 0.05 * jax.random.normal(k_wp, (F, D), dtype=jnp.float32),
        "bproj": 0.01 * jax.random.normal(k_bp, (D,), dtype=jnp.float32),
        "gamma": jnp.ones((D,), dtype=jnp.float32),                   # RMSNorm weight
    }

    out = jax.block_until_ready(multimodal_encoder_forward(images, params))
    ref = jax.block_until_ready(_reference(images, params))

    assert out.shape == (B, D)
    # bf16 matmul inputs (+ bf16 elementwise on v6e/v7x) vs full-f32 reference
    # -> loose tolerance.
    assert jnp.allclose(out, ref, atol=4e-2, rtol=4e-2), "mismatch vs reference"

    print("KERNEL_OK")
</pallas_src>

<mosaic_0001>
module attributes {stable_mosaic.version = 11 : i64} {
  func.func @_conv_pool_kernel(%arg0: i32, %arg1: i32, %arg2: i32, %arg3: memref<8x48x32xbf16, #tpu.memory_space<vmem>>, %arg4: memref<32x128xbf16, #tpu.memory_space<vmem>>, %arg5: memref<1x128xf32, #tpu.memory_space<vmem>>, %arg6: memref<1x8x128xf32, #tpu.memory_space<vmem>>) attributes {dimension_semantics = [#tpu.dimension_semantics<parallel>, #tpu.dimension_semantics<parallel>, #tpu.dimension_semantics<arbitrary>], iteration_bounds = array<i64: 1, 2, 1>, scalar_prefetch = 0 : i64, scratch_operands = 0 : i64, tpu.core_type = #tpu.core_type<tc>, window_params = [{transform_indices = @transform_0, window_bounds = array<i64: 8, 48, 32>}, {pipeline_mode = #tpu.pipeline_mode<synchronous>, transform_indices = @transform_1, window_bounds = array<i64: 32, 128>}, {pipeline_mode = #tpu.pipeline_mode<synchronous>, transform_indices = @transform_2, window_bounds = array<i64: 1, 128>}, {transform_indices = @transform_3, window_bounds = array<i64: 1, 8, 128>}]} {
    %c0_i32 = arith.constant 0 : i32
    %0 = arith.cmpi eq, %arg2, %c0_i32 : i32
    %1 = arith.extui %0 : i1 to i32
    %c0_i32_0 = arith.constant 0 : i32
    %2 = arith.cmpi ne, %1, %c0_i32_0 : i32
    scf.if %2 {
      %cst_15 = arith.constant 0.000000e+00 : f32
      %24 = vector.broadcast %cst_15 : f32 to vector<1x8x128xf32>
      %c0_16 = arith.constant 0 : index
      %c0_17 = arith.constant 0 : index
      %c0_18 = arith.constant 0 : index
      %25 = vector.load %arg6[%c0_16, %c0_17, %c0_18] : memref<1x8x128xf32, #tpu.memory_space<vmem>>, vector<1x8x128xf32>
      tpu.vector_store %arg6[%c0_16, %c0_17, %c0_18], %24 {strides = array<i32>} : memref<1x8x128xf32, #tpu.memory_space<vmem>>, vector<1x8x128xf32>,
    } else {
    }
    %c0 = arith.constant 0 : index
    %c0_1 = arith.constant 0 : index
    %c0_2 = arith.constant 0 : index
    %3 = vector.load %arg3[%c0, %c0_1, %c0_2] : memref<8x48x32xbf16, #tpu.memory_space<vmem>>, vector<8x48x32xbf16>
    %4 = vector.shape_cast %3 : vector<8x48x32xbf16> to vector<384x32xbf16>
    %c0_3 = arith.constant 0 : index
    %c0_4 = arith.constant 0 : index
    %5 = vector.load %arg4[%c0_3, %c0_4] : memref<32x128xbf16, #tpu.memory_space<vmem>>, vector<32x128xbf16>
    %cst = arith.constant dense<0.000000e+00> : vector<384x128xf32>
    %6 = tpu.matmul %4, %5, %cst {dimension_numbers = #tpu.dot_dimension_numbers<[1], [0], [0], [1], [0, 0, 1, 1], [], []>} : vector<384x32xbf16>, vector<32x128xbf16>, vector<384x128xf32> -> vector<384x128xf32>
    %c0_5 = arith.constant 0 : index
    %c0_6 = arith.constant 0 : index
    %7 = vector.load %arg5[%c0_5, %c0_6] : memref<1x128xf32, #tpu.memory_space<vmem>>, vector<1x128xf32>
    %8 = vector.broadcast %7 : vector<1x128xf32> to vector<384x128xf32>
    %9 = arith.addf %6, %8 : vector<384x128xf32>
    %10 = arith.negf %9 : vector<384x128xf32>
    %11 = math.exp %10 : vector<384x128xf32>
    %cst_7 = arith.constant 1.000000e+00 : f32
    %12 = vector.broadcast %cst_7 : f32 to vector<384x128xf32>
    %13 = arith.addf %12, %11 : vector<384x128xf32>
    %14 = arith.divf %12, %13 : vector<384x128xf32>
    %15 = arith.mulf %9, %14 : vector<384x128xf32>
    %16 = vector.shape_cast %15 : vector<384x128xf32> to vector<8x48x128xf32>
    %c0_8 = arith.constant 0 : index
    %c0_9 = arith.constant 0 : index
    %c0_10 = arith.constant 0 : index
    %17 = vector.load %arg6[%c0_8, %c0_9, %c0_10] : memref<1x8x128xf32, #tpu.memory_space<vmem>>, vector<1x8x128xf32>
    %18 = vector.shape_cast %17 : vector<1x8x128xf32> to vector<8x128xf32>
    %cst_11 = arith.constant dense<0.000000e+00> : vector<8x128xf32>
    %19 = vector.multi_reduction <add>, %16, %cst_11 [1] : vector<8x48x128xf32> to vector<8x128xf32>
    %20 = arith.addf %18, %19 : vector<8x128xf32>
    %c0_12 = arith.constant 0 : index
    %c0_13 = arith.constant 0 : index
    %c0_14 = arith.constant 0 : index
    %21 = vector.load %arg6[%c0_12, %c0_13, %c0_14] : memref<1x8x128xf32, #tpu.memory_space<vmem>>, vector<1x8x128xf32>
    %22 = vector.shape_cast %21 : vector<1x8x128xf32> to vector<8x128xf32>
    %23 = vector.shape_cast %20 : vector<8x128xf32> to vector<1x8x128xf32>
    tpu.vector_store %arg6[%c0_12, %c0_13, %c0_14], %23 {strides = array<i32>} : memref<1x8x128xf32, #tpu.memory_space<vmem>>, vector<1x8x128xf32>,
    return
  }
  func.func @transform_0(%arg0: i32, %arg1: i32, %arg2: i32) -> (i32, i32, i32) {
    %c1_i32 = arith.constant 1 : i32
    %0 = arith.muli %arg1, %c1_i32 : i32
    %1 = arith.addi %0, %arg2 : i32
    %c0_i32 = arith.constant 0 : i32
    %c0_i32_0 = arith.constant 0 : i32
    return %arg0, %1, %c0_i32 : i32, i32, i32
  }
  func.func @transform_1(%arg0: i32, %arg1: i32, %arg2: i32) -> (i32, i32) {
    %c0_i32 = arith.constant 0 : i32
    %c0_i32_0 = arith.constant 0 : i32
    %c0_i32_1 = arith.constant 0 : i32
    return %c0_i32, %c0_i32_0 : i32, i32
  }
  func.func @transform_2(%arg0: i32, %arg1: i32, %arg2: i32) -> (i32, i32) {
    %c0_i32 = arith.constant 0 : i32
    %c0_i32_0 = arith.constant 0 : i32
    %c0_i32_1 = arith.constant 0 : i32
    return %c0_i32, %c0_i32_0 : i32, i32
  }
  func.func @transform_3(%arg0: i32, %arg1: i32, %arg2: i32) -> (i32, i32, i32) {
    %c0_i32 = arith.constant 0 : i32
    %c0_i32_0 = arith.constant 0 : i32
    return %arg1, %arg0, %c0_i32 : i32, i32, i32
  }
}

</mosaic_0001>

<llo_original>
// kernel: tpu_custom_call.1
$region0: #{tpu_custom_call.1}
  #allocation0 [shape = 'u32[]', space=smem, size = 0x4, offset = 0x4, fixed_abs, tag = 'smem constant byte address 0x4 - core index']
  #allocation1 [shape = 'u32[144,128]{1,0:T(1,128)}', space=vmem, size = 0x12000, scoped, tag = 'internal scratch']
  %s0 = inlined_call_operand.vmem [shape: bf16[8,96,32], index: 0, kind: input, shape index: {}]
  %s1 = inlined_call_operand.vmem [shape: bf16[32,128], index: 1, kind: input, shape index: {}]
  %s2 = inlined_call_operand.vmem [shape: f32[1,128], index: 2, kind: input, shape index: {}]
  %s3 = inlined_call_operand.hbm [shape: f32[2,8,128], index: 3, kind: output, shape index: {}]
  %s4 = sld [smem:[#allocation0]]
  $region90: #{tpu_custom_call.1} parent=0
    _
  %s6 = ssub.s32 1, %s4
  %s7 = scalar_select 0, %s6, %s4
  $region1: #{tpu_custom_call.1} parent=0
    #allocation2 [shape = 'u8[196608]{0}', space=vmem, size = 0x30000, scoped, tag = 'input window, operand 0']
    #allocation3 [shape = 'u8[8192]{0}', space=vmem, size = 0x2000, scoped, tag = 'output window, operand 0']
    #allocation4 [shape = 's32[2]{0}', space=sflag, size = 0x8, scoped, tag = 'scoped memory for tpu_custom_call.1']
    %8 = vsyncpa [#allocation4], 0
    %s9 = scalar_lea.sflag [#allocation4], 1
    %10 = vsyncpa %s9, 0
    loop: start=0, step=1, limit=4
    $region2: #{tpu_custom_call.1} parent=1 // loop_pre_header
      _
    $region3: #{tpu_custom_call.1} parent=1 // loop_header
      %s12 = sphi 0, %s16
      %p13 = scmp.ge.s32.totalorder %s12, 4
      %s19 = sphi 0, %s38
      %s20 = sphi 0, %s34
      %s21 = sphi 0, %s30
      %s22 = sphi 0, %s19
      %s23 = sphi 0, %s20
      %s24 = sphi 0, %s21
      %s25 = sphi 0, %s22
      %s26 = sphi 0, %s23
      %s27 = sphi 0, %s24
      %s45 = sphi 0, %s47
      %s48 = sphi 0, %s45
      %s49 = sphi 0, %s48
      %s65 = sphi 0, %s49
      %s69 = sphi 0, %s69
      %s71 = sphi 0, %s69
      %s72 = sphi 0, %s71
      %s86 = sphi 0, %s72
      %s90 = sphi 0, %s90
      %s92 = sphi 0, %s90
      %s93 = sphi 0, %s92
      %s107 = sphi 0, %s93
      %s115 = sphi 0, %s117
      %s118 = sphi 0, %s115
      %s119 = sphi 0, %s118
      %s135 = sphi 0, %s119
    $region4: #{tpu_custom_call.1} parent=1 // loop_header_branch
      %15 = sbr.rel (%p13) target = $region8
    $region5: #{tpu_custom_call.1} parent=1 // loop_body
      %s17 = ssub.s32 %s12, 1
      %s18 = ssub.s32 %s12, 2
      %s28 = sadd.s32 1, %s21
      %p29 = scmp.ge.s32.totalorder %s28, 1
      %s30 = scalar_select %p29, 0, %s28
      %s31 = sadd.s32 1, %s20
      %s32 = scalar_select %p29, %s31, %s20
      %p33 = scmp.ge.s32.totalorder %s32, 2
      %s34 = scalar_select %p33, 0, %s32
      %s35 = sadd.s32 1, %s19
      %s36 = scalar_select %p33, %s35, %s19
      %p37 = scmp.ge.s32.totalorder %s36, 1
      %s38 = scalar_select %p37, 0, %s36
      %s39 = sadd.s32 %s20, %s21
      %s40 = sadd.s32 %s34, %s30
      %s41 = ssub.s32 %s19, %s38
      %s42 = ssub.s32 %s39, %s40
      %s43 = sor.u32 %s41, %s42
      %p44 = scmp.eq.s32.totalorder %s43, 0
      %s46 = sadd.s32 %s45, 1
      %s47 = scalar_select %p44, %s45, %s46
      %p50 = pneg %p44
      %p51 = scmp.eq.s32.totalorder %s12, 1
      %p52 = por %p50, %p51
      %p53 = scmp.ne.s32.totalorder %s45, %s48
      %p54 = scmp.eq.s32.totalorder %s12, 0
      %p55 = por %p53, %p54
      %p56 = scmp.ne.s32.totalorder %s45, %s48
      %p57 = scmp.eq.s32.totalorder %s17, 1
      %p58 = por %p56, %p57
      %p59 = scmp.ne.s32.totalorder %s48, %s49
      %p60 = scmp.eq.s32.totalorder %s17, 0
      %p61 = por %p59, %p60
      %p62 = scmp.ne.s32.totalorder %s48, %s49
      %p63 = scmp.eq.s32.totalorder %s18, 1
      %p64 = por %p62, %p63
      %p66 = scmp.ne.s32.totalorder %s49, %s65
      %p67 = scmp.eq.s32.totalorder %s18, 0
      %p68 = por %p66, %p67
      %s70 = sadd.s32 %s69, 1
      %p73 = scmp.eq.s32.totalorder %s12, 1
      %p74 = scmp.ne.s32.totalorder %s69, %s71
      %p75 = scmp.eq.s32.totalorder %s12, 0
      %p76 = por %p74, %p75
      %p77 = scmp.ne.s32.totalorder %s69, %s71
      %p78 = scmp.eq.s32.totalorder %s17, 1
      %p79 = por %p77, %p78
      %p80 = scmp.ne.s32.totalorder %s71, %s72
      %p81 = scmp.eq.s32.totalorder %s17, 0
      %p82 = por %p80, %p81
      %p83 = scmp.ne.s32.totalorder %s71, %s72
      %p84 = scmp.eq.s32.totalorder %s18, 1
      %p85 = por %p83, %p84
      %p87 = scmp.ne.s32.totalorder %s72, %s86
      %p88 = scmp.eq.s32.totalorder %s18, 0
      %p89 = por %p87, %p88
      %s91 = sadd.s32 %s90, 1
      %p94 = scmp.eq.s32.totalorder %s12, 1
      %p95 = scmp.ne.s32.totalorder %s90, %s92
      %p96 = scmp.eq.s32.totalorder %s12, 0
      %p97 = por %p95, %p96
      %p98 = scmp.ne.s32.totalorder %s90, %s92
      %p99 = scmp.eq.s32.totalorder %s17, 1
      %p100 = por %p98, %p99
      %p101 = scmp.ne.s32.totalorder %s92, %s93
      %p102 = scmp.eq.s32.totalorder %s17, 0
      %p103 = por %p101, %p102
      %p104 = scmp.ne.s32.totalorder %s92, %s93
      %p105 = scmp.eq.s32.totalorder %s18, 1
      %p106 = por %p104, %p105
      %p108 = scmp.ne.s32.totalorder %s93, %s107
      %p109 = scmp.eq.s32.totalorder %s18, 0
      %p110 = por %p108, %p109
      %s111 = ssub.s32 %s20, %s34
      %s112 = ssub.s32 %s19, %s38
      %s113 = sor.u32 %s111, %s112
      %p114 = scmp.eq.s32.totalorder %s113, 0
      %s116 = sadd.s32 %s115, 1
      %s117 = scalar_select %p114, %s115, %s116
      %p120 = pneg %p114
      %p121 = scmp.eq.s32.totalorder %s12, 1
      %p122 = por %p120, %p121
      %p123 = scmp.ne.s32.totalorder %s115, %s118
      %p124 = scmp.eq.s32.totalorder %s12, 0
      %p125 = por %p123, %p124
      %p126 = scmp.ne.s32.totalorder %s115, %s118
      %p127 = scmp.eq.s32.totalorder %s17, 1
      %p128 = por %p126, %p127
      %p129 = scmp.ne.s32.totalorder %s118, %s119
      %p130 = scmp.eq.s32.totalorder %s17, 0
      %p131 = por %p129, %p130
      %p132 = scmp.ne.s32.totalorder %s118, %s119
      %p133 = scmp.eq.s32.totalorder %s18, 1
      %p134 = por %p132, %p133
      %p136 = scmp.ne.s32.totalorder %s119, %s135
      %p137 = scmp.eq.s32.totalorder %s18, 0
      %p138 = por %p136, %p137
      %p139 = scmp.le.s32.totalorder 1, %s12
      %p140 = scmp.lt.s32.totalorder %s12, 3
      %p141 = pnand %p139, %p140
      %p142 = pneg %p141
      // Predicated region
      $region9: #{tpu_custom_call.1} parent=5 // pred_check
        _
      $region10: #{tpu_custom_call.1} parent=5 // pred_check_branch
        %144 = sbr.rel (%p141) target = $region12
      $region11: #{tpu_custom_call.1} parent=5 // pred_region
        %s145 = ssub.s32 %s12, 1
        // Predicated region
        $region13: #{tpu_custom_call.1} parent=11 // pred_check
          %p146 = pneg %p82
        $region14: #{tpu_custom_call.1} parent=11 // pred_check_branch
          %148 = sbr.rel (%p146) target = $region16
        $region15: #{tpu_custom_call.1} parent=11 // pred_region
          _
        $region16: #{tpu_custom_call.1} parent=11 // pred_fallthru
          _
        // Predicated region
        $region17: #{tpu_custom_call.1} parent=11 // pred_check
          %p149 = pneg %p103
        $region18: #{tpu_custom_call.1} parent=11 // pred_check_branch
          %151 = sbr.rel (%p149) target = $region20
        $region19: #{tpu_custom_call.1} parent=11 // pred_region
          _
        $region20: #{tpu_custom_call.1} parent=11 // pred_fallthru
          _
      $region12: #{tpu_custom_call.1} parent=5 // pred_fallthru
        _
      %p152 = scmp.lt.s32.totalorder %s12, 2
      // Predicated region
      $region21: #{tpu_custom_call.1} parent=5 // pred_check
        %p153 = pneg %p152
      $region22: #{tpu_custom_call.1} parent=5 // pred_check_branch
        %155 = sbr.rel (%p153) target = $region24
      $region23: #{tpu_custom_call.1} parent=5 // pred_region
        // Predicated region
        $region25: #{tpu_custom_call.1} parent=23 // pred_check
          %p156 = pneg %p55
        $region26: #{tpu_custom_call.1} parent=23 // pred_check_branch
          %158 = sbr.rel (%p156) target = $region28
        $region27: #{tpu_custom_call.1} parent=23 // pred_region
          %s159 = sand.u32 %s45, 1
          %s160 = sand.u32 %s45, 1
          %s161 = smul.addr %s160, 192
          %s162 = scalar_lea.vmem [#allocation2], %s161
          %s163 = sadd.s32 %s20, %s21
          %s164 = smul.u32 8, %s19
          %s165 = smul.u32 6, %s163
          %s166 = smul.addr %s164, 12
          %s167 = sadd.s32 %s165, %s166
          %s168 = smul.addr %s167, 4
          %s169 = scalar_lea.vmem %s0, %s168
          // Predicated region
          $region29: #{tpu_custom_call.1} parent=27 // pred_check
            _
          $region30: #{tpu_custom_call.1} parent=27 // pred_check_branch
            %171 = sbr.rel (0) target = $region32
          $region31: #{tpu_custom_call.1} parent=27 // pred_region
            // Predicated region
            $region33: #{tpu_custom_call.1} parent=31 // pred_check
              _
            $region34: #{tpu_custom_call.1} parent=31 // pred_check_branch
              %173 = sbr.rel target = $region36
            $region35: #{tpu_custom_call.1} parent=31 // pred_region
              // Predicated region
              $region48: #{tpu_custom_call.1} parent=35 // pred_check
                _
              $region49: #{tpu_custom_call.1} parent=35 // pred_check_branch
                %282 = sbr.rel (0) target = $region51
              $region50: #{tpu_custom_call.1} parent=35 // pred_region
                loop: start=0, step=1, limit=1
                $region52: #{tpu_custom_call.1} parent=50 // loop_pre_header
                  _
                $region53: #{tpu_custom_call.1} parent=50 // loop_header
                  %s284 = sphi 0, %s288
                  %p285 = scmp.ge.s32.totalorder %s284, 1
                  %s289 = sphi %s169, %s169
                  %s290 = sphi %s162, %s162
                $region54: #{tpu_custom_call.1} parent=50 // loop_header_branch
                  %287 = sbr.rel (%p285) target = $region58
                $region55: #{tpu_custom_call.1} parent=50 // loop_body
                  _
                $region56: #{tpu_custom_call.1} parent=50 // loop_footer
                  %s288 = sadd.s32 1, %s284
                $region57: #{tpu_custom_call.1} parent=50 // loop_footer_branch
                  %283 = sbr.rel target = $region53
                $region58: #{tpu_custom_call.1} parent=50 // loop_exit
                  _
                loop: start=0, step=1, limit=1
                $region59: #{tpu_custom_call.1} parent=50 // loop_pre_header
                  _
                $region60: #{tpu_custom_call.1} parent=50 // loop_header
                  %s293 = sphi 0, %s297
                  %p294 = scmp.ge.s32.totalorder %s293, 1
                  %s298 = sphi %s169, %s169
                  %s299 = sphi %s162, %s162
                $region61: #{tpu_custom_call.1} parent=50 // loop_header_branch
                  %296 = sbr.rel (%p294) target = $region65
                $region62: #{tpu_custom_call.1} parent=50 // loop_body
                  %v300 = vld [vmem:[%s298] sm:$0xf]
                  %301 = vst [vmem:[%s299] sm:$0xf] %v300
                  %v302 = vld [vmem:[%s298 + $0x4] sm:$0xf]
                  %303 = vst [vmem:[%s299 + $0x4] sm:$0xf] %v302
                  %v304 = vld [vmem:[%s298 + $0x8] sm:$0xf]
                  %305 = vst [vmem:[%s299 + $0x8] sm:$0xf] %v304
                  %v306 = vld [vmem:[%s298 + $0xc] sm:$0xf]
                  %307 = vst [vmem:[%s299 + $0xc] sm:$0xf] %v306
                  %v308 = vld [vmem:[%s298 + $0x10] sm:$0xf]
                  %309 = vst [vmem:[%s299 + $0x10] sm:$0xf] %v308
                  %v310 = vld [vmem:[%s298 + $0x14] sm:$0xf]
                  %311 = vst [vmem:[%s299 + $0x14] sm:$0xf] %v310
                  %v312 = vld [vmem:[%s298 + $0x30] sm:$0xf]
                  %313 = vst [vmem:[%s299 + $0x18] sm:$0xf] %v312
                  %v314 = vld [vmem:[%s298 + $0x34] sm:$0xf]
                  %315 = vst [vmem:[%s299 + $0x1c] sm:$0xf] %v314
                  %v316 = vld [vmem:[%s298 + $0x38] sm:$0xf]
                  %317 = vst [vmem:[%s299 + $0x20] sm:$0xf] %v316
                  %v318 = vld [vmem:[%s298 + $0x3c] sm:$0xf]
                  %319 = vst [vmem:[%s299 + $0x24] sm:$0xf] %v318
                  %v320 = vld [vmem:[%s298 + $0x40] sm:$0xf]
                  %321 = vst [vmem:[%s299 + $0x28] sm:$0xf] %v320
                  %v322 = vld [vmem:[%s298 + $0x44] sm:$0xf]
                  %323 = vst [vmem:[%s299 + $0x2c] sm:$0xf] %v322
                  %v324 = vld [vmem:[%s298 + $0x60] sm:$0xf]
                  %325 = vst [vmem:[%s299 + $0x30] sm:$0xf] %v324
                  %v326 = vld [vmem:[%s298 + $0x64] sm:$0xf]
                  %327 = vst [vmem:[%s299 + $0x34] sm:$0xf] %v326
                  %v328 = vld [vmem:[%s298 + $0x68] sm:$0xf]
                  %329 = vst [vmem:[%s299 + $0x38] sm:$0xf] %v328
                  %v330 = vld [vmem:[%s298 + $0x6c] sm:$0xf]
                  %331 = vst [vmem:[%s299 + $0x3c] sm:$0xf] %v330
                  %v332 = vld [vmem:[%s298 + $0x70] sm:$0xf]
                  %333 = vst [vmem:[%s299 + $0x40] sm:$0xf] %v332
                  %v334 = vld [vmem:[%s298 + $0x74] sm:$0xf]
                  %335 = vst [vmem:[%s299 + $0x44] sm:$0xf] %v334
                  %v336 = vld [vmem:[%s298 + $0x90] sm:$0xf]
                  %337 = vst [vmem:[%s299 + $0x48] sm:$0xf] %v336
                  %v338 = vld [vmem:[%s298 + $0x94] sm:$0xf]
                  %339 = vst [vmem:[%s299 + $0x4c] sm:$0xf] %v338
                  %v340 = vld [vmem:[%s298 + $0x98] sm:$0xf]
                  %341 = vst [vmem:[%s299 + $0x50] sm:$0xf] %v340
                  %v342 = vld [vmem:[%s298 + $0x9c] sm:$0xf]
                  %343 = vst [vmem:[%s299 + $0x54] sm:$0xf] %v342
                  %v344 = vld [vmem:[%s298 + $0xa0] sm:$0xf]
                  %345 = vst [vmem:[%s299 + $0x58] sm:$0xf] %v344
                  %v346 = vld [vmem:[%s298 + $0xa4] sm:$0xf]
                  %347 = vst [vmem:[%s299 + $0x5c] sm:$0xf] %v346
                  %v348 = vld [vmem:[%s298 + $0xc0] sm:$0xf]
                  %349 = vst [vmem:[%s299 + $0x60] sm:$0xf] %v348
                  %v350 = vld [vmem:[%s298 + $0xc4] sm:$0xf]
                  %351 = vst [vmem:[%s299 + $0x64] sm:$0xf] %v350
                  %v352 = vld [vmem:[%s298 + $0xc8] sm:$0xf]
                  %353 = vst [vmem:[%s299 + $0x68] sm:$0xf] %v352
                  %v354 = vld [vmem:[%s298 + $0xcc] sm:$0xf]
                  %355 = vst [vmem:[%s299 + $0x6c] sm:$0xf] %v354
                  %v356 = vld [vmem:[%s298 + $0xd0] sm:$0xf]
                  %357 = vst [vmem:[%s299 + $0x70] sm:$0xf] %v356
                  %v358 = vld [vmem:[%s298 + $0xd4] sm:$0xf]
                  %359 = vst [vmem:[%s299 + $0x74] sm:$0xf] %v358
                  %v360 = vld [vmem:[%s298 + $0xf0] sm:$0xf]
                  %361 = vst [vmem:[%s299 + $0x78] sm:$0xf] %v360
                  %v362 = vld [vmem:[%s298 + $0xf4] sm:$0xf]
                  %363 = vst [vmem:[%s299 + $0x7c] sm:$0xf] %v362
                  %v364 = vld [vmem:[%s298 + $0xf8] sm:$0xf]
                  %365 = vst [vmem:[%s299 + $0x80] sm:$0xf] %v364
                  %v366 = vld [vmem:[%s298 + $0xfc] sm:$0xf]
                  %367 = vst [vmem:[%s299 + $0x84] sm:$0xf] %v366
                  %v368 = vld [vmem:[%s298 + $0x100] sm:$0xf]
                  %369 = vst [vmem:[%s299 + $0x88] sm:$0xf] %v368
                  %v370 = vld [vmem:[%s298 + $0x104] sm:$0xf]
                  %371 = vst [vmem:[%s299 + $0x8c] sm:$0xf] %v370
                  %v372 = vld [vmem:[%s298 + $0x120] sm:$0xf]
                  %373 = vst [vmem:[%s299 + $0x90] sm:$0xf] %v372
                  %v374 = vld [vmem:[%s298 + $0x124] sm:$0xf]
                  %375 = vst [vmem:[%s299 + $0x94] sm:$0xf] %v374
                  %v376 = vld [vmem:[%s298 + $0x128] sm:$0xf]
                  %377 = vst [vmem:[%s299 + $0x98] sm:$0xf] %v376
                  %v378 = vld [vmem:[%s298 + $0x12c] sm:$0xf]
                  %379 = vst [vmem:[%s299 + $0x9c] sm:$0xf] %v378
                  %v380 = vld [vmem:[%s298 + $0x130] sm:$0xf]
                  %381 = vst [vmem:[%s299 + $0xa0] sm:$0xf] %v380
                  %v382 = vld [vmem:[%s298 + $0x134] sm:$0xf]
                  %383 = vst [vmem:[%s299 + $0xa4] sm:$0xf] %v382
                  %v384 = vld [vmem:[%s298 + $0x150] sm:$0xf]
                  %385 = vst [vmem:[%s299 + $0xa8] sm:$0xf] %v384
                  %v386 = vld [vmem:[%s298 + $0x154] sm:$0xf]
                  %387 = vst [vmem:[%s299 + $0xac] sm:$0xf] %v386
                  %v388 = vld [vmem:[%s298 + $0x158] sm:$0xf]
                  %389 = vst [vmem:[%s299 + $0xb0] sm:$0xf] %v388
                  %v390 = vld [vmem:[%s298 + $0x15c] sm:$0xf]
                  %391 = vst [vmem:[%s299 + $0xb4] sm:$0xf] %v390
                  %v392 = vld [vmem:[%s298 + $0x160] sm:$0xf]
                  %393 = vst [vmem:[%s299 + $0xb8] sm:$0xf] %v392
                  %v394 = vld [vmem:[%s298 + $0x164] sm:$0xf]
                  %395 = vst [vmem:[%s299 + $0xbc] sm:$0xf] %v394
                $region63: #{tpu_custom_call.1} parent=50 // loop_footer
                  %s297 = sadd.s32 1, %s293
                $region64: #{tpu_custom_call.1} parent=50 // loop_footer_branch
                  %292 = sbr.rel target = $region60
                $region65: #{tpu_custom_call.1} parent=50 // loop_exit
                  _
              $region51: #{tpu_custom_call.1} parent=35 // pred_fallthru
                _
            $region36: #{tpu_custom_call.1} parent=31 // pred_fallthru
              _
            // Predicated region
            $region37: #{tpu_custom_call.1} parent=31 // pred_check
              _
            $region38: #{tpu_custom_call.1} parent=31 // pred_check_branch
              %175 = sbr.rel (0) target = $region40
            $region39: #{tpu_custom_call.1} parent=31 // pred_region
              loop: start=0, step=1, limit=1
              $region41: #{tpu_custom_call.1} parent=39 // loop_pre_header
                _
              $region42: #{tpu_custom_call.1} parent=39 // loop_header
                %s178 = sphi 0, %s182
                %p179 = scmp.ge.s32.totalorder %s178, 1
                %s183 = sphi %s169, %s169
                %s184 = sphi %s162, %s162
              $region43: #{tpu_custom_call.1} parent=39 // loop_header_branch
                %181 = sbr.rel (%p179) target = $region47
              $region44: #{tpu_custom_call.1} parent=39 // loop_body
                %v185 = vld [vmem:[%s183] sm:$0xf]
                %186 = vst [vmem:[%s184] sm:$0xf] %v185
                %v187 = vld [vmem:[%s183 + $0x4] sm:$0xf]
                %188 = vst [vmem:[%s184 + $0x4] sm:$0xf] %v187
                %v189 = vld [vmem:[%s183 + $0x8] sm:$0xf]
                %190 = vst [vmem:[%s184 + $0x8] sm:$0xf] %v189
                %v191 = vld [vmem:[%s183 + $0xc] sm:$0xf]
                %192 = vst [vmem:[%s184 + $0xc] sm:$0xf] %v191
                %v193 = vld [vmem:[%s183 + $0x10] sm:$0xf]
                %194 = vst [vmem:[%s184 + $0x10] sm:$0xf] %v193
                %v195 = vld [vmem:[%s183 + $0x14] sm:$0xf]
                %196 = vst [vmem:[%s184 + $0x14] sm:$0xf] %v195
                %v197 = vld [vmem:[%s183 + $0x30] sm:$0xf]
                %198 = vst [vmem:[%s184 + $0x18] sm:$0xf] %v197
                %v199 = vld [vmem:[%s183 + $0x34] sm:$0xf]
                %200 = vst [vmem:[%s184 + $0x1c] sm:$0xf] %v199
                %v201 = vld [vmem:[%s183 + $0x38] sm:$0xf]
                %202 = vst [vmem:[%s184 + $0x20] sm:$0xf] %v201
                %v203 = vld [vmem:[%s183 + $0x3c] sm:$0xf]
                %204 = vst [vmem:[%s184 + $0x24] sm:$0xf] %v203
                %v205 = vld [vmem:[%s183 + $0x40] sm:$0xf]
                %206 = vst [vmem:[%s184 + $0x28] sm:$0xf] %v205
                %v207 = vld [vmem:[%s183 + $0x44] sm:$0xf]
                %208 = vst [vmem:[%s184 + $0x2c] sm:$0xf] %v207
                %v209 = vld [vmem:[%s183 + $0x60] sm:$0xf]
                %210 = vst [vmem:[%s184 + $0x30] sm:$0xf] %v209
                %v211 = vld [vmem:[%s183 + $0x64] sm:$0xf]
                %212 = vst [vmem:[%s184 + $0x34] sm:$0xf] %v211
                %v213 = vld [vmem:[%s183 + $0x68] sm:$0xf]
                %214 = vst [vmem:[%s184 + $0x38] sm:$0xf] %v213
                %v215 = vld [vmem:[%s183 + $0x6c] sm:$0xf]
                %216 = vst [vmem:[%s184 + $0x3c] sm:$0xf] %v215
                %v217 = vld [vmem:[%s183 + $0x70] sm:$0xf]
                %218 = vst [vmem:[%s184 + $0x40] sm:$0xf] %v217
                %v219 = vld [vmem:[%s183 + $0x74] sm:$0xf]
                %220 = vst [vmem:[%s184 + $0x44] sm:$0xf] %v219
                %v221 = vld [vmem:[%s183 + $0x90] sm:$0xf]
                %222 = vst [vmem:[%s184 + $0x48] sm:$0xf] %v221
                %v223 = vld [vmem:[%s183 + $0x94] sm:$0xf]
                %224 = vst [vmem:[%s184 + $0x4c] sm:$0xf] %v223
                %v225 = vld [vmem:[%s183 + $0x98] sm:$0xf]
                %226 = vst [vmem:[%s184 + $0x50] sm:$0xf] %v225
                %v227 = vld [vmem:[%s183 + $0x9c] sm:$0xf]
                %228 = vst [vmem:[%s184 + $0x54] sm:$0xf] %v227
                %v229 = vld [vmem:[%s183 + $0xa0] sm:$0xf]
                %230 = vst [vmem:[%s184 + $0x58] sm:$0xf] %v229
                %v231 = vld [vmem:[%s183 + $0xa4] sm:$0xf]
                %232 = vst [vmem:[%s184 + $0x5c] sm:$0xf] %v231
                %v233 = vld [vmem:[%s183 + $0xc0] sm:$0xf]
                %234 = vst [vmem:[%s184 + $0x60] sm:$0xf] %v233
                %v235 = vld [vmem:[%s183 + $0xc4] sm:$0xf]
                %236 = vst [vmem:[%s184 + $0x64] sm:$0xf] %v235
                %v237 = vld [vmem:[%s183 + $0xc8] sm:$0xf]
                %238 = vst [vmem:[%s184 + $0x68] sm:$0xf] %v237
                %v239 = vld [vmem:[%s183 + $0xcc] sm:$0xf]
                %240 = vst [vmem:[%s184 + $0x6c] sm:$0xf] %v239
                %v241 = vld [vmem:[%s183 + $0xd0] sm:$0xf]
                %242 = vst [vmem:[%s184 + $0x70] sm:$0xf] %v241
                %v243 = vld [vmem:[%s183 + $0xd4] sm:$0xf]
                %244 = vst [vmem:[%s184 + $0x74] sm:$0xf] %v243
                %v245 = vld [vmem:[%s183 + $0xf0] sm:$0xf]
                %246 = vst [vmem:[%s184 + $0x78] sm:$0xf] %v245
                %v247 = vld [vmem:[%s183 + $0xf4] sm:$0xf]
                %248 = vst [vmem:[%s184 + $0x7c] sm:$0xf] %v247
                %v249 = vld [vmem:[%s183 + $0xf8] sm:$0xf]
                %250 = vst [vmem:[%s184 + $0x80] sm:$0xf] %v249
                %v251 = vld [vmem:[%s183 + $0xfc] sm:$0xf]
                %252 = vst [vmem:[%s184 + $0x84] sm:$0xf] %v251
                %v253 = vld [vmem:[%s183 + $0x100] sm:$0xf]
                %254 = vst [vmem:[%s184 + $0x88] sm:$0xf] %v253
                %v255 = vld [vmem:[%s183 + $0x104] sm:$0xf]
                %256 = vst [vmem:[%s184 + $0x8c] sm:$0xf] %v255
                %v257 = vld [vmem:[%s183 + $0x120] sm:$0xf]
                %258 = vst [vmem:[%s184 + $0x90] sm:$0xf] %v257
                %v259 = vld [vmem:[%s183 + $0x124] sm:$0xf]
                %260 = vst [vmem:[%s184 + $0x94] sm:$0xf] %v259
                %v261 = vld [vmem:[%s183 + $0x128] sm:$0xf]
                %262 = vst [vmem:[%s184 + $0x98] sm:$0xf] %v261
                %v263 = vld [vmem:[%s183 + $0x12c] sm:$0xf]
                %264 = vst [vmem:[%s184 + $0x9c] sm:$0xf] %v263
                %v265 = vld [vmem:[%s183 + $0x130] sm:$0xf]
                %266 = vst [vmem:[%s184 + $0xa0] sm:$0xf] %v265
                %v267 = vld [vmem:[%s183 + $0x134] sm:$0xf]
                %268 = vst [vmem:[%s184 + $0xa4] sm:$0xf] %v267
                %v269 = vld [vmem:[%s183 + $0x150] sm:$0xf]
                %270 = vst [vmem:[%s184 + $0xa8] sm:$0xf] %v269
                %v271 = vld [vmem:[%s183 + $0x154] sm:$0xf]
                %272 = vst [vmem:[%s184 + $0xac] sm:$0xf] %v271
                %v273 = vld [vmem:[%s183 + $0x158] sm:$0xf]
                %274 = vst [vmem:[%s184 + $0xb0] sm:$0xf] %v273
                %v275 = vld [vmem:[%s183 + $0x15c] sm:$0xf]
                %276 = vst [vmem:[%s184 + $0xb4] sm:$0xf] %v275
                %v277 = vld [vmem:[%s183 + $0x160] sm:$0xf]
                %278 = vst [vmem:[%s184 + $0xb8] sm:$0xf] %v277
                %v279 = vld [vmem:[%s183 + $0x164] sm:$0xf]
                %280 = vst [vmem:[%s184 + $0xbc] sm:$0xf] %v279
              $region45: #{tpu_custom_call.1} parent=39 // loop_footer
                %s182 = sadd.s32 1, %s178
              $region46: #{tpu_custom_call.1} parent=39 // loop_footer_branch
                %177 = sbr.rel target = $region42
              $region47: #{tpu_custom_call.1} parent=39 // loop_exit
                _
            $region40: #{tpu_custom_call.1} parent=31 // pred_fallthru
              _
          $region32: #{tpu_custom_call.1} parent=27 // pred_fallthru
            _
          %396 = vnop
        $region28: #{tpu_custom_call.1} parent=23 // pred_fallthru
          _
      $region24: #{tpu_custom_call.1} parent=5 // pred_fallthru
        _
      %p397 = scmp.le.s32.totalorder 1, %s12
      %p398 = scmp.lt.s32.totalorder %s12, 3
      %p399 = pnand %p397, %p398
      %p400 = pneg %p399
      // Predicated region
      $region66: #{tpu_custom_call.1} parent=5 // pred_check
        _
      $region67: #{tpu_custom_call.1} parent=5 // pred_check_branch
        %402 = sbr.rel (%p399) target = $region69
      $region68: #{tpu_custom_call.1} parent=5 // pred_region
        %s403 = ssub.s32 %s12, 1
        %s404 = sand.u32 %s48, 1
        %s405 = sand.u32 %s48, 1
        %s406 = smul.addr %s405, 192
        %s407 = scalar_lea.vmem [#allocation2], %s406
        // Predicated region
        $region70: #{tpu_custom_call.1} parent=68 // pred_check
          %p408 = pneg %p61
        $region71: #{tpu_custom_call.1} parent=68 // pred_check_branch
          %410 = sbr.rel (%p408) target = $region73
        $region72: #{tpu_custom_call.1} parent=68 // pred_region
          _
        $region73: #{tpu_custom_call.1} parent=68 // pred_fallthru
          _
        %s411 = sand.u32 %s48, 1
        %s412 = sand.u32 %s48, 1
        %s413 = smul.addr %s412, 192
        %s414 = scalar_lea.vmem [#allocation2], %s413
        %p415 = pneg %p61
        %p416 = pneg %p58
        %p417 = pneg %p82
        %p418 = pneg %p79
        %p419 = pneg %p103
        %p420 = pneg %p100
        %p421 = pneg %p131
        %p422 = pneg %p128
        %s423 = sand.u32 %s118, 1
        %s424 = scalar_lea.sflag [#allocation4], %s423
        %s425 = sand.u32 %s118, 1
        %s426 = smul.addr %s425, 8
        %s427 = scalar_lea.vmem [#allocation3], %s426
        %s428 = sadd.s32 %s23, %s24
        %s429 = smul.u32 8, %s22
        %s430 = smul.u32 6, %s428
        %p432 = scmp.eq.s32.totalorder %s24, 0
        // Predicated region
        $region74: #{tpu_custom_call.1} parent=68 // pred_check
          %p433 = pneg %p432
        $region75: #{tpu_custom_call.1} parent=68 // pred_check_branch
          %435 = sbr.rel (%p433) target = $region77
        $region76: #{tpu_custom_call.1} parent=68 // pred_region
          %436 = vst [vmem:[%s427] sm:$0xff] 0.0
        $region77: #{tpu_custom_call.1} parent=68 // pred_fallthru
          _
        %v437 = vld [vmem:[%s407] sm:$0xf]
        %v438 = vld [vmem:[%s407 + $0x4] sm:$0xf]
        %v439 = vld [vmem:[%s407 + $0x8] sm:$0xf]
        %v440 = vld [vmem:[%s407 + $0xc] sm:$0xf]
        %v441 = vld [vmem:[%s407 + $0x10] sm:$0xf]
        %v442 = vld [vmem:[%s407 + $0x14] sm:$0xf]
        %v443 = vld [vmem:[%s407 + $0x18] sm:$0xf]
        %v444 = vld [vmem:[%s407 + $0x1c] sm:$0xf]
        %v445 = vld [vmem:[%s407 + $0x20] sm:$0xf]
        %v446 = vld [vmem:[%s407 + $0x24] sm:$0xf]
        %v447 = vld [vmem:[%s407 + $0x28] sm:$0xf]
        %v448 = vld [vmem:[%s407 + $0x2c] sm:$0xf]
        %v449 = vld [vmem:[%s407 + $0x30] sm:$0xf]
        %v450 = vld [vmem:[%s407 + $0x34] sm:$0xf]
        %v451 = vld [vmem:[%s407 + $0x38] sm:$0xf]
        %v452 = vld [vmem:[%s407 + $0x3c] sm:$0xf]
        %v453 = vld [vmem:[%s407 + $0x40] sm:$0xf]
        %v454 = vld [vmem:[%s407 + $0x44] sm:$0xf]
        %v455 = vld [vmem:[%s407 + $0x48] sm:$0xf]
        %v456 = vld [vmem:[%s407 + $0x4c] sm:$0xf]
        %v457 = vld [vmem:[%s407 + $0x50] sm:$0xf]
        %v458 = vld [vmem:[%s407 + $0x54] sm:$0xf]
        %v459 = vld [vmem:[%s407 + $0x58] sm:$0xf]
        %v460 = vld [vmem:[%s407 + $0x5c] sm:$0xf]
        %v461 = vld [vmem:[%s407 + $0x60] sm:$0xf]
        %v462 = vld [vmem:[%s407 + $0x64] sm:$0xf]
        %v463 = vld [vmem:[%s407 + $0x68] sm:$0xf]
        %v464 = vld [vmem:[%s407 + $0x6c] sm:$0xf]
        %v465 = vld [vmem:[%s407 + $0x70] sm:$0xf]
        %v466 = vld [vmem:[%s407 + $0x74] sm:$0xf]
        %v467 = vld [vmem:[%s407 + $0x78] sm:$0xf]
        %v468 = vld [vmem:[%s407 + $0x7c] sm:$0xf]
        %v469 = vld [vmem:[%s407 + $0x80] sm:$0xf]
        %v470 = vld [vmem:[%s407 + $0x84] sm:$0xf]
        %v471 = vld [vmem:[%s407 + $0x88] sm:$0xf]
        %v472 = vld [vmem:[%s407 + $0x8c] sm:$0xf]
        %v473 = vld [vmem:[%s407 + $0x90] sm:$0xf]
        %v474 = vld [vmem:[%s407 + $0x94] sm:$0xf]
        %v475 = vld [vmem:[%s407 + $0x98] sm:$0xf]
        %v476 = vld [vmem:[%s407 + $0x9c] sm:$0xf]
        %v477 = vld [vmem:[%s407 + $0xa0] sm:$0xf]
        %v478 = vld [vmem:[%s407 + $0xa4] sm:$0xf]
        %v479 = vld [vmem:[%s407 + $0xa8] sm:$0xf]
        %v480 = vld [vmem:[%s407 + $0xac] sm:$0xf]
        %v481 = vld [vmem:[%s407 + $0xb0] sm:$0xf]
        %v482 = vld [vmem:[%s407 + $0xb4] sm:$0xf]
        %v483 = vld [vmem:[%s407 + $0xb8] sm:$0xf]
        %v484 = vld [vmem:[%s407 + $0xbc] sm:$0xf]
        %v485 = vld [vmem:[%s1] sm:$0xf]
        %v486 = vld [vmem:[%s1 + $0x4] sm:$0xf]
        %v487 = vld [vmem:[%s1 + $0x8] sm:$0xf]
        %v488 = vld [vmem:[%s1 + $0xc] sm:$0xf]
        %v489 = vld [vmem:[%s2] sm:$0x1]
        %v491 = vlaneseq
        %v492 = vshrl.u32 %v491, 7
        %v493 = vsub.s32 0, %v492
        %v494 = vrot.slane %v489, %v493
        %v544 = vunpack.c.l.b16 %v437
        %v545 = vunpack.c.l.b16 %v438
        %v546 = vunpack.c.l.b16 %v439
        %v547 = vunpack.c.l.b16 %v440
        %v548 = vunpack.c.l.b16 %v441
        %v549 = vunpack.c.l.b16 %v442
        %v550 = vunpack.c.l.b16 %v443
        %v551 = vunpack.c.l.b16 %v444
        %v552 = vunpack.c.l.b16 %v445
        %v553 = vunpack.c.l.b16 %v446
        %v554 = vunpack.c.l.b16 %v447
        %v555 = vunpack.c.l.b16 %v448
        %v556 = vunpack.c.l.b16 %v449
        %v557 = vunpack.c.l.b16 %v450
        %v558 = vunpack.c.l.b16 %v451
        %v559 = vunpack.c.l.b16 %v452
        %v560 = vunpack.c.l.b16 %v453
        %v561 = vunpack.c.l.b16 %v454
        %v562 = vunpack.c.l.b16 %v455
        %v563 = vunpack.c.l.b16 %v456
        %v564 = vunpack.c.l.b16 %v457
        %v565 = vunpack.c.l.b16 %v458
        %v566 = vunpack.c.l.b16 %v459
        %v567 = vunpack.c.l.b16 %v460
        %v568 = vunpack.c.l.b16 %v461
        %v569 = vunpack.c.l.b16 %v462
        %v570 = vunpack.c.l.b16 %v463
        %v571 = vunpack.c.l.b16 %v464
        %v572 = vunpack.c.l.b16 %v465
        %v573 = vunpack.c.l.b16 %v466
        %v574 = vunpack.c.l.b16 %v467
        %v575 = vunpack.c.l.b16 %v468
        %v576 = vunpack.c.l.b16 %v469
        %v577 = vunpack.c.l.b16 %v470
        %v578 = vunpack.c.l.b16 %v471
        %v579 = vunpack.c.l.b16 %v472
        %v580 = vunpack.c.l.b16 %v473
        %v581 = vunpack.c.l.b16 %v474
        %v582 = vunpack.c.l.b16 %v475
        %v583 = vunpack.c.l.b16 %v476
        %v584 = vunpack.c.l.b16 %v477
        %v585 = vunpack.c.l.b16 %v478
        %v586 = vunpack.c.l.b16 %v479
        %v587 = vunpack.c.l.b16 %v480
        %v588 = vunpack.c.l.b16 %v481
        %v589 = vunpack.c.l.b16 %v482
        %v590 = vunpack.c.l.b16 %v483
        %v591 = vunpack.c.l.b16 %v484
        %v592 = vpack.c.b16 %v545, %v544
        %v593 = vpack.c.b16 %v547, %v546
        %v594 = vpack.c.b16 %v549, %v548
        %v595 = vpack.c.b16 %v551, %v550
        %v596 = vpack.c.b16 %v553, %v552
        %v597 = vpack.c.b16 %v555, %v554
        %v598 = vpack.c.b16 %v557, %v556
        %v599 = vpack.c.b16 %v559, %v558
        %v600 = vpack.c.b16 %v561, %v560
        %v601 = vpack.c.b16 %v563, %v562
        %v602 = vpack.c.b16 %v565, %v564
        %v603 = vpack.c.b16 %v567, %v566
        %v604 = vpack.c.b16 %v569, %v568
        %v605 = vpack.c.b16 %v571, %v570
        %v606 = vpack.c.b16 %v573, %v572
        %v607 = vpack.c.b16 %v575, %v574
        %v608 = vpack.c.b16 %v577, %v576
        %v609 = vpack.c.b16 %v579, %v578
        %v610 = vpack.c.b16 %v581, %v580
        %v611 = vpack.c.b16 %v583, %v582
        %v612 = vpack.c.b16 %v585, %v584
        %v613 = vpack.c.b16 %v587, %v586
        %v614 = vpack.c.b16 %v589, %v588
        %v615 = vpack.c.b16 %v591, %v590
        %v620 = vunpack.c.l.b16 %v485
        %v621 = vunpack.c.l.b16 %v486
        %v622 = vunpack.c.l.b16 %v487
        %v623 = vunpack.c.l.b16 %v488
        %v624 = vpack.c.b16 %v621, %v620
        %v625 = vpack.c.b16 %v623, %v622
        %vm628 = vcmask 261120
        %v630 = vsel %vm628, %v592, 0
        %v633 = vsel %vm628, %v593, 0
        %v636 = vsel %vm628, %v594, 0
        %v639 = vsel %vm628, %v595, 0
        %v642 = vsel %vm628, %v596, 0
        %v645 = vsel %vm628, %v597, 0
        %v648 = vsel %vm628, %v598, 0
        %v651 = vsel %vm628, %v599, 0
        %v654 = vsel %vm628, %v600, 0
        %v657 = vsel %vm628, %v601, 0
        %v660 = vsel %vm628, %v602, 0
        %v663 = vsel %vm628, %v603, 0
        %v666 = vsel %vm628, %v604, 0
        %v669 = vsel %vm628, %v605, 0
        %v672 = vsel %vm628, %v606, 0
        %v675 = vsel %vm628, %v607, 0
        %v678 = vsel %vm628, %v608, 0
        %v681 = vsel %vm628, %v609, 0
        %v684 = vsel %vm628, %v610, 0
        %v687 = vsel %vm628, %v611, 0
        %v690 = vsel %vm628, %v612, 0
        %v693 = vsel %vm628, %v613, 0
        %v696 = vsel %vm628, %v614, 0
        %v699 = vsel %vm628, %v615, 0
        %701 = vmatprep.subr.bf16.mxu0 0
        %702 = vmatpush1.bf16.msra.mxu0 %v624
        %703 = vmatprep.subr.bf16.mxu0 0
        %704 = vmatpush1.bf16.msra.mxu0 %v625
        %705 = vmatprep.subr.bf16.mxu0 0
        %706 = vmatpush1.bf16.msra.mxu0 0
        %707 = vmatprep.subr.bf16.mxu0 0
        %708 = vmatpush1.bf16.msra.mxu0 0
        %709 = vmatprep.subr.bf16.mxu0 0
        %710 = vmatpush1.bf16.msra.mxu0 0
        %711 = vmatprep.subr.bf16.mxu0 0
        %712 = vmatpush1.bf16.msra.mxu0 0
        %713 = vmatprep.subr.bf16.mxu0 0
        %714 = vmatpush1.bf16.msra.mxu0 0
        %715 = vmatprep.subr.bf16.mxu0 0
        %716 = vmatpush1.bf16.msra.mxu0 0
        %717 = vmatprep.subr.bf16.mxu0 0
        %718 = vmatpush1.bf16.msra.mxu0 0
        %719 = vmatprep.subr.bf16.mxu0 0
        %720 = vmatpush1.bf16.msra.mxu0 0
        %721 = vmatprep.subr.bf16.mxu0 0
        %722 = vmatpush1.bf16.msra.mxu0 0
        %723 = vmatprep.subr.bf16.mxu0 0
        %724 = vmatpush1.bf16.msra.mxu0 0
        %725 = vmatprep.subr.bf16.mxu0 0
        %726 = vmatpush1.bf16.msra.mxu0 0
        %727 = vmatprep.subr.bf16.mxu0 0
        %728 = vmatpush1.bf16.msra.mxu0 0
        %729 = vmatprep.subr.bf16.mxu0 0
        %730 = vmatpush1.bf16.msra.mxu0 0
        %731 = vmatprep.subr.bf16.mxu0 0
        %732 = vmatpush1.bf16.msra.mxu0 0
        %733 = vmatprep.mubr.bf16.mxu0 0
        %734 = vmatmul.mubr.bf16.gmra.mrb[0].mxu0 %v630
        %v735 = vpop.f32.mrb[0].mxu0
        %v736 = vadd.f32 %v494, %v735
        %v737 = vpop.f32.mrb[0].mxu0
        %v738 = vpop.f32.mrb[0].mxu0
        %v739 = vadd.f32 %v494, %v738
        %v740 = vpop.f32.mrb[0].mxu0
        %741 = vmatprep.mubr.bf16.mxu0 0
        %742 = vmatmul.mubr.bf16.gmra.mrb[0].mxu0 %v633
        %v743 = vpop.f32.mrb[0].mxu0
        %v744 = vadd.f32 %v494, %v743
        %v745 = vpop.f32.mrb[0].mxu0
        %v746 = vpop.f32.mrb[0].mxu0
        %v747 = vadd.f32 %v494, %v746
        %v748 = vpop.f32.mrb[0].mxu0
        %749 = vmatprep.mubr.bf16.mxu0 0
        %750 = vmatmul.mubr.bf16.gmra.mrb[0].mxu0 %v636
        %v751 = vpop.f32.mrb[0].mxu0
        %v752 = vadd.f32 %v494, %v751
        %v753 = vpop.f32.mrb[0].mxu0
        %v754 = vpop.f32.mrb[0].mxu0
        %v755 = vadd.f32 %v494, %v754
        %v756 = vpop.f32.mrb[0].mxu0
        %757 = vmatprep.mubr.bf16.mxu0 0
        %758 = vmatmul.mubr.bf16.gmra.mrb[0].mxu0 %v639
        %v759 = vpop.f32.mrb[0].mxu0
        %v760 = vadd.f32 %v494, %v759
        %v761 = vpop.f32.mrb[0].mxu0
        %v762 = vpop.f32.mrb[0].mxu0
        %v763 = vadd.f32 %v494, %v762
        %v764 = vpop.f32.mrb[0].mxu0
        %765 = vmatprep.mubr.bf16.mxu0 0
        %766 = vmatmul.mubr.bf16.gmra.mrb[0].mxu0 %v642
        %v767 = vpop.f32.mrb[0].mxu0
        %v768 = vadd.f32 %v494, %v767
        %v769 = vpop.f32.mrb[0].mxu0
        %v770 = vpop.f32.mrb[0].mxu0
        %v771 = vadd.f32 %v494, %v770
        %v772 = vpop.f32.mrb[0].mxu0
        %773 = vmatprep.mubr.bf16.mxu0 0
        %774 = vmatmul.mubr.bf16.gmra.mrb[0].mxu0 %v645
        %v775 = vpop.f32.mrb[0].mxu0
        %v776 = vadd.f32 %v494, %v775
        %v777 = vpop.f32.mrb[0].mxu0
        %v778 = vpop.f32.mrb[0].mxu0
        %v779 = vadd.f32 %v494, %v778
        %v780 = vpop.f32.mrb[0].mxu0
        %781 = vmatprep.mubr.bf16.mxu0 0
        %782 = vmatmul.mubr.bf16.gmra.mrb[0].mxu0 %v648
        %v783 = vpop.f32.mrb[0].mxu0
        %v784 = vadd.f32 %v494, %v783
        %v785 = vpop.f32.mrb[0].mxu0
        %v786 = vpop.f32.mrb[0].mxu0
        %v787 = vadd.f32 %v494, %v786
        %v788 = vpop.f32.mrb[0].mxu0
        %789 = vmatprep.mubr.bf16.mxu0 0
        %790 = vmatmul.mubr.bf16.gmra.mrb[0].mxu0 %v651
        %v791 = vpop.f32.mrb[0].mxu0
        %v792 = vadd.f32 %v494, %v791
        %v793 = vpop.f32.mrb[0].mxu0
        %v794 = vpop.f32.mrb[0].mxu0
        %v795 = vadd.f32 %v494, %v794
        %v796 = vpop.f32.mrb[0].mxu0
        %797 = vmatprep.mubr.bf16.mxu0 0
        %798 = vmatmul.mubr.bf16.gmra.mrb[0].mxu0 %v654
        %v799 = vpop.f32.mrb[0].mxu0
        %v800 = vadd.f32 %v494, %v799
        %v801 = vpop.f32.mrb[0].mxu0
        %v802 = vpop.f32.mrb[0].mxu0
        %v803 = vadd.f32 %v494, %v802
        %v804 = vpop.f32.mrb[0].mxu0
        %805 = vmatprep.mubr.bf16.mxu0 0
        %806 = vmatmul.mubr.bf16.gmra.mrb[0].mxu0 %v657
        %v807 = vpop.f32.mrb[0].mxu0
        %v808 = vadd.f32 %v494, %v807
        %v809 = vpop.f32.mrb[0].mxu0
        %v810 = vpop.f32.mrb[0].mxu0
        %v811 = vadd.f32 %v494, %v810
        %v812 = vpop.f32.mrb[0].mxu0
        %813 = vmatprep.mubr.bf16.mxu0 0
        %814 = vmatmul.mubr.bf16.gmra.mrb[0].mxu0 %v660
        %v815 = vpop.f32.mrb[0].mxu0
        %v816 = vadd.f32 %v494, %v815
        %v817 = vpop.f32.mrb[0].mxu0
        %v818 = vpop.f32.mrb[0].mxu0
        %v819 = vadd.f32 %v494, %v818
        %v820 = vpop.f32.mrb[0].mxu0
        %821 = vmatprep.mubr.bf16.mxu0 0
        %822 = vmatmul.mubr.bf16.gmra.mrb[0].mxu0 %v663
        %v823 = vpop.f32.mrb[0].mxu0
        %v824 = vadd.f32 %v494, %v823
        %v825 = vpop.f32.mrb[0].mxu0
        %v826 = vpop.f32.mrb[0].mxu0
        %v827 = vadd.f32 %v494, %v826
        %v828 = vpop.f32.mrb[0].mxu0
        %829 = vmatprep.mubr.bf16.mxu0 0
        %830 = vmatmul.mubr.bf16.gmra.mrb[0].mxu0 %v666
        %v831 = vpop.f32.mrb[0].mxu0
        %v832 = vadd.f32 %v494, %v831
        %v833 = vpop.f32.mrb[0].mxu0
        %v834 = vpop.f32.mrb[0].mxu0
        %v835 = vadd.f32 %v494, %v834
        %v836 = vpop.f32.mrb[0].mxu0
        %837 = vmatprep.mubr.bf16.mxu0 0
        %838 = vmatmul.mubr.bf16.gmra.mrb[0].mxu0 %v669
        %v839 = vpop.f32.mrb[0].mxu0
        %v840 = vadd.f32 %v494, %v839
        %v841 = vpop.f32.mrb[0].mxu0
        %v842 = vpop.f32.mrb[0].mxu0
        %v843 = vadd.f32 %v494, %v842
        %v844 = vpop.f32.mrb[0].mxu0
        %845 = vmatprep.mubr.bf16.mxu0 0
        %846 = vmatmul.mubr.bf16.gmra.mrb[0].mxu0 %v672
        %v847 = vpop.f32.mrb[0].mxu0
        %v848 = vadd.f32 %v494, %v847
        %v849 = vpop.f32.mrb[0].mxu0
        %v850 = vpop.f32.mrb[0].mxu0
        %v851 = vadd.f32 %v494, %v850
        %v852 = vpop.f32.mrb[0].mxu0
        %853 = vmatprep.mubr.bf16.mxu0 0
        %854 = vmatmul.mubr.bf16.gmra.mrb[0].mxu0 %v675
        %v855 = vpop.f32.mrb[0].mxu0
        %v856 = vadd.f32 %v494, %v855
        %v857 = vpop.f32.mrb[0].mxu0
        %v858 = vpop.f32.mrb[0].mxu0
        %v859 = vadd.f32 %v494, %v858
        %v860 = vpop.f32.mrb[0].mxu0
        %861 = vmatprep.mubr.bf16.mxu0 0
        %862 = vmatmul.mubr.bf16.gmra.mrb[0].mxu0 %v678
        %v863 = vpop.f32.mrb[0].mxu0
        %v864 = vadd.f32 %v494, %v863
        %v865 = vpop.f32.mrb[0].mxu0
        %v866 = vpop.f32.mrb[0].mxu0
        %v867 = vadd.f32 %v494, %v866
        %v868 = vpop.f32.mrb[0].mxu0
        %869 = vmatprep.mubr.bf16.mxu0 0
        %870 = vmatmul.mubr.bf16.gmra.mrb[0].mxu0 %v681
        %v871 = vpop.f32.mrb[0].mxu0
        %v872 = vadd.f32 %v494, %v871
        %v873 = vpop.f32.mrb[0].mxu0
        %v874 = vpop.f32.mrb[0].mxu0
        %v875 = vadd.f32 %v494, %v874
        %v876 = vpop.f32.mrb[0].mxu0
        %877 = vmatprep.mubr.bf16.mxu0 0
        %878 = vmatmul.mubr.bf16.gmra.mrb[0].mxu0 %v684
        %v879 = vpop.f32.mrb[0].mxu0
        %v880 = vadd.f32 %v494, %v879
        %v881 = vpop.f32.mrb[0].mxu0
        %v882 = vpop.f32.mrb[0].mxu0
        %v883 = vadd.f32 %v494, %v882
        %v884 = vpop.f32.mrb[0].mxu0
        %885 = vmatprep.mubr.bf16.mxu0 0
        %886 = vmatmul.mubr.bf16.gmra.mrb[0].mxu0 %v687
        %v887 = vpop.f32.mrb[0].mxu0
        %v888 = vadd.f32 %v494, %v887
        %v889 = vpop.f32.mrb[0].mxu0
        %v890 = vpop.f32.mrb[0].mxu0
        %v891 = vadd.f32 %v494, %v890
        %v892 = vpop.f32.mrb[0].mxu0
        %893 = vmatprep.mubr.bf16.mxu0 0
        %894 = vmatmul.mubr.bf16.gmra.mrb[0].mxu0 %v690
        %v895 = vpop.f32.mrb[0].mxu0
        %v896 = vadd.f32 %v494, %v895
        %v897 = vpop.f32.mrb[0].mxu0
        %v898 = vpop.f32.mrb[0].mxu0
        %v899 = vadd.f32 %v494, %v898
        %v900 = vpop.f32.mrb[0].mxu0
        %901 = vmatprep.mubr.bf16.mxu0 0
        %902 = vmatmul.mubr.bf16.gmra.mrb[0].mxu0 %v693
        %v903 = vpop.f32.mrb[0].mxu0
        %v904 = vadd.f32 %v494, %v903
        %v905 = vpop.f32.mrb[0].mxu0
        %v906 = vpop.f32.mrb[0].mxu0
        %v907 = vadd.f32 %v494, %v906
        %v908 = vpop.f32.mrb[0].mxu0
        %909 = vmatprep.mubr.bf16.mxu0 0
        %910 = vmatmul.mubr.bf16.gmra.mrb[0].mxu0 %v696
        %v911 = vpop.f32.mrb[0].mxu0
        %v912 = vadd.f32 %v494, %v911
        %v913 = vpop.f32.mrb[0].mxu0
        %v914 = vpop.f32.mrb[0].mxu0
        %v915 = vadd.f32 %v494, %v914
        %v916 = vpop.f32.mrb[0].mxu0
        %917 = vmatprep.mubr.bf16.mxu0 0
        %918 = vmatmul.mubr.bf16.gmra.mrb[0].mxu0 %v699
        %v919 = vpop.f32.mrb[0].mxu0
        %v920 = vadd.f32 %v494, %v919
        %v921 = vpop.f32.mrb[0].mxu0
        %v922 = vpop.f32.mrb[0].mxu0
        %v923 = vadd.f32 %v494, %v922
        %v924 = vpop.f32.mrb[0].mxu0
        %925 = vdwg.mxu0
        %v926 = vxor.u32 %v736, 2147483648
        %v927 = vxor.u32 %v739, 2147483648
        %v928 = vxor.u32 %v744, 2147483648
        %v929 = vxor.u32 %v747, 2147483648
        %v930 = vxor.u32 %v752, 2147483648
        %v931 = vxor.u32 %v755, 2147483648
        %v932 = vxor.u32 %v760, 2147483648
        %v933 = vxor.u32 %v763, 2147483648
        %v934 = vxor.u32 %v768, 2147483648
        %v935 = vxor.u32 %v771, 2147483648
        %v936 = vxor.u32 %v776, 2147483648
        %v937 = vxor.u32 %v779, 2147483648
        %v938 = vxor.u32 %v784, 2147483648
        %v939 = vxor.u32 %v787, 2147483648
        %v940 = vxor.u32 %v792, 2147483648
        %v941 = vxor.u32 %v795, 2147483648
        %v942 = vxor.u32 %v800, 2147483648
        %v943 = vxor.u32 %v803, 2147483648
        %v944 = vxor.u32 %v808, 2147483648
        %v945 = vxor.u32 %v811, 2147483648
        %v946 = vxor.u32 %v816, 2147483648
        %v947 = vxor.u32 %v819, 2147483648
        %v948 = vxor.u32 %v824, 2147483648
        %v949 = vxor.u32 %v827, 2147483648
        %v950 = vxor.u32 %v832, 2147483648
        %v951 = vxor.u32 %v835, 2147483648
        %v952 = vxor.u32 %v840, 2147483648
        %v953 = vxor.u32 %v843, 2147483648
        %v954 = vxor.u32 %v848, 2147483648
        %v955 = vxor.u32 %v851, 2147483648
        %v956 = vxor.u32 %v856, 2147483648
        %v957 = vxor.u32 %v859, 2147483648
        %v958 = vxor.u32 %v864, 2147483648
        %v959 = vxor.u32 %v867, 2147483648
        %v960 = vxor.u32 %v872, 2147483648
        %v961 = vxor.u32 %v875, 2147483648
        %v962 = vxor.u32 %v880, 2147483648
        %v963 = vxor.u32 %v883, 2147483648
        %v964 = vxor.u32 %v888, 2147483648
        %v965 = vxor.u32 %v891, 2147483648
        %v966 = vxor.u32 %v896, 2147483648
        %v967 = vxor.u32 %v899, 2147483648
        %v968 = vxor.u32 %v904, 2147483648
        %v969 = vxor.u32 %v907, 2147483648
        %v970 = vxor.u32 %v912, 2147483648
        %v971 = vxor.u32 %v915, 2147483648
        %v972 = vxor.u32 %v920, 2147483648
        %v973 = vxor.u32 %v923, 2147483648
        %v974 = vmul.f32 %v926, 1.442695
        %v975 = vpow.pop %v974
        %v976 = vmul.f32 %v927, 1.442695
        %v977 = vpow.pop %v976
        %v978 = vmul.f32 %v928, 1.442695
        %v979 = vpow.pop %v978
        %v980 = vmul.f32 %v929, 1.442695
        %v981 = vpow.pop %v980
        %v982 = vmul.f32 %v930, 1.442695
        %v983 = vpow.pop %v982
        %v984 = vmul.f32 %v931, 1.442695
        %v985 = vpow.pop %v984
        %v986 = vmul.f32 %v932, 1.442695
        %v987 = vpow.pop %v986
        %v988 = vmul.f32 %v933, 1.442695
        %v989 = vpow.pop %v988
        %v990 = vmul.f32 %v934, 1.442695
        %v991 = vpow.pop %v990
        %v992 = vmul.f32 %v935, 1.442695
        %v993 = vpow.pop %v992
        %v994 = vmul.f32 %v936, 1.442695
        %v995 = vpow.pop %v994
        %v996 = vmul.f32 %v937, 1.442695
        %v997 = vpow.pop %v996
        %v998 = vmul.f32 %v938, 1.442695
        %v999 = vpow.pop %v998
        %v1000 = vmul.f32 %v939, 1.442695
        %v1001 = vpow.pop %v1000
        %v1002 = vmul.f32 %v940, 1.442695
        %v1003 = vpow.pop %v1002
        %v1004 = vmul.f32 %v941, 1.442695
        %v1005 = vpow.pop %v1004
        %v1006 = vmul.f32 %v942, 1.442695
        %v1007 = vpow.pop %v1006
        %v1008 = vmul.f32 %v943, 1.442695
        %v1009 = vpow.pop %v1008
        %v1010 = vmul.f32 %v944, 1.442695
        %v1011 = vpow.pop %v1010
        %v1012 = vmul.f32 %v945, 1.442695
        %v1013 = vpow.pop %v1012
        %v1014 = vmul.f32 %v946, 1.442695
        %v1015 = vpow.pop %v1014
        %v1016 = vmul.f32 %v947, 1.442695
        %v1017 = vpow.pop %v1016
        %v1018 = vmul.f32 %v948, 1.442695
        %v1019 = vpow.pop %v1018
        %v1020 = vmul.f32 %v949, 1.442695
        %v1021 = vpow.pop %v1020
        %v1022 = vmul.f32 %v950, 1.442695
        %v1023 = vpow.pop %v1022
        %v1024 = vmul.f32 %v951, 1.442695
        %v1025 = vpow.pop %v1024
        %v1026 = vmul.f32 %v952, 1.442695
        %v1027 = vpow.pop %v1026
        %v1028 = vmul.f32 %v953, 1.442695
        %v1029 = vpow.pop %v1028
        %v1030 = vmul.f32 %v954, 1.442695
        %v1031 = vpow.pop %v1030
        %v1032 = vmul.f32 %v955, 1.442695
        %v1033 = vpow.pop %v1032
        %v1034 = vmul.f32 %v956, 1.442695
        %v1035 = vpow.pop %v1034
        %v1036 = vmul.f32 %v957, 1.442695
        %v1037 = vpow.pop %v1036
        %v1038 = vmul.f32 %v958, 1.442695
        %v1039 = vpow.pop %v1038
        %v1040 = vmul.f32 %v959, 1.442695
        %v1041 = vpow.pop %v1040
        %v1042 = vmul.f32 %v960, 1.442695
        %v1043 = vpow.pop %v1042
        %v1044 = vmul.f32 %v961, 1.442695
        %v1045 = vpow.pop %v1044
        %v1046 = vmul.f32 %v962, 1.442695
        %v1047 = vpow.pop %v1046
        %v1048 = vmul.f32 %v963, 1.442695
        %v1049 = vpow.pop %v1048
        %v1050 = vmul.f32 %v964, 1.442695
        %v1051 = vpow.pop %v1050
        %v1052 = vmul.f32 %v965, 1.442695
        %v1053 = vpow.pop %v1052
        %v1054 = vmul.f32 %v966, 1.442695
        %v1055 = vpow.pop %v1054
        %v1056 = vmul.f32 %v967, 1.442695
        %v1057 = vpow.pop %v1056
        %v1058 = vmul.f32 %v968, 1.442695
        %v1059 = vpow.pop %v1058
        %v1060 = vmul.f32 %v969, 1.442695
        %v1061 = vpow.pop %v1060
        %v1062 = vmul.f32 %v970, 1.442695
        %v1063 = vpow.pop %v1062
        %v1064 = vmul.f32 %v971, 1.442695
        %v1065 = vpow.pop %v1064
        %v1066 = vmul.f32 %v972, 1.442695
        %v1067 = vpow.pop %v1066
        %v1068 = vmul.f32 %v973, 1.442695
        %v1069 = vpow.pop %v1068
        %v1070 = vadd.f32 %v975, 1.0
        %v1071 = vadd.f32 %v977, 1.0
        %v1072 = vadd.f32 %v979, 1.0
        %v1073 = vadd.f32 %v981, 1.0
        %v1074 = vadd.f32 %v983, 1.0
        %v1075 = vadd.f32 %v985, 1.0
        %v1076 = vadd.f32 %v987, 1.0
        %v1077 = vadd.f32 %v989, 1.0
        %v1078 = vadd.f32 %v991, 1.0
        %v1079 = vadd.f32 %v993, 1.0
        %v1080 = vadd.f32 %v995, 1.0
        %v1081 = vadd.f32 %v997, 1.0
        %v1082 = vadd.f32 %v999, 1.0
        %v1083 = vadd.f32 %v1001, 1.0
        %v1084 = vadd.f32 %v1003, 1.0
        %v1085 = vadd.f32 %v1005, 1.0
        %v1086 = vadd.f32 %v1007, 1.0
        %v1087 = vadd.f32 %v1009, 1.0
        %v1088 = vadd.f32 %v1011, 1.0
        %v1089 = vadd.f32 %v1013, 1.0
        %v1090 = vadd.f32 %v1015, 1.0
        %v1091 = vadd.f32 %v1017, 1.0
        %v1092 = vadd.f32 %v1019, 1.0
        %v1093 = vadd.f32 %v1021, 1.0
        %v1094 = vadd.f32 %v1023, 1.0
        %v1095 = vadd.f32 %v1025, 1.0
        %v1096 = vadd.f32 %v1027, 1.0
        %v1097 = vadd.f32 %v1029, 1.0
        %v1098 = vadd.f32 %v1031, 1.0
        %v1099 = vadd.f32 %v1033, 1.0
        %v1100 = vadd.f32 %v1035, 1.0
        %v1101 = vadd.f32 %v1037, 1.0
        %v1102 = vadd.f32 %v1039, 1.0
        %v1103 = vadd.f32 %v1041, 1.0
        %v1104 = vadd.f32 %v1043, 1.0
        %v1105 = vadd.f32 %v1045, 1.0
        %v1106 = vadd.f32 %v1047, 1.0
        %v1107 = vadd.f32 %v1049, 1.0
        %v1108 = vadd.f32 %v1051, 1.0
        %v1109 = vadd.f32 %v1053, 1.0
        %v1110 = vadd.f32 %v1055, 1.0
        %v1111 = vadd.f32 %v1057, 1.0
        %v1112 = vadd.f32 %v1059, 1.0
        %v1113 = vadd.f32 %v1061, 1.0
        %v1114 = vadd.f32 %v1063, 1.0
        %v1115 = vadd.f32 %v1065, 1.0
        %v1116 = vadd.f32 %v1067, 1.0
        %v1117 = vadd.f32 %v1069, 1.0
        %v1118 = vrcp.pop %v1070
        %v1119 = vmul.f32 1.0, %v1118
        %v1120 = vrcp.pop %v1071
        %v1121 = vmul.f32 1.0, %v1120
        %v1122 = vrcp.pop %v1072
        %v1123 = vmul.f32 1.0, %v1122
        %v1124 = vrcp.pop %v1073
        %v1125 = vmul.f32 1.0, %v1124
        %v1126 = vrcp.pop %v1074
        %v1127 = vmul.f32 1.0, %v1126
        %v1128 = vrcp.pop %v1075
        %v1129 = vmul.f32 1.0, %v1128
        %v1130 = vrcp.pop %v1076
        %v1131 = vmul.f32 1.0, %v1130
        %v1132 = vrcp.pop %v1077
        %v1133 = vmul.f32 1.0, %v1132
        %v1134 = vrcp.pop %v1078
        %v1135 = vmul.f32 1.0, %v1134
        %v1136 = vrcp.pop %v1079
        %v1137 = vmul.f32 1.0, %v1136
        %v1138 = vrcp.pop %v1080
        %v1139 = vmul.f32 1.0, %v1138
        %v1140 = vrcp.pop %v1081
        %v1141 = vmul.f32 1.0, %v1140
        %v1142 = vrcp.pop %v1082
        %v1143 = vmul.f32 1.0, %v1142
        %v1144 = vrcp.pop %v1083
        %v1145 = vmul.f32 1.0, %v1144
        %v1146 = vrcp.pop %v1084
        %v1147 = vmul.f32 1.0, %v1146
        %v1148 = vrcp.pop %v1085
        %v1149 = vmul.f32 1.0, %v1148
        %v1150 = vrcp.pop %v1086
        %v1151 = vmul.f32 1.0, %v1150
        %v1152 = vrcp.pop %v1087
        %v1153 = vmul.f32 1.0, %v1152
        %v1154 = vrcp.pop %v1088
        %v1155 = vmul.f32 1.0, %v1154
        %v1156 = vrcp.pop %v1089
        %v1157 = vmul.f32 1.0, %v1156
        %v1158 = vrcp.pop %v1090
        %v1159 = vmul.f32 1.0, %v1158
        %v1160 = vrcp.pop %v1091
        %v1161 = vmul.f32 1.0, %v1160
        %v1162 = vrcp.pop %v1092
        %v1163 = vmul.f32 1.0, %v1162
        %v1164 = vrcp.pop %v1093
        %v1165 = vmul.f32 1.0, %v1164
        %v1166 = vrcp.pop %v1094
        %v1167 = vmul.f32 1.0, %v1166
        %v1168 = vrcp.pop %v1095
        %v1169 = vmul.f32 1.0, %v1168
        %v1170 = vrcp.pop %v1096
        %v1171 = vmul.f32 1.0, %v1170
        %v1172 = vrcp.pop %v1097
        %v1173 = vmul.f32 1.0, %v1172
        %v1174 = vrcp.pop %v1098
        %v1175 = vmul.f32 1.0, %v1174
        %v1176 = vrcp.pop %v1099
        %v1177 = vmul.f32 1.0, %v1176
        %v1178 = vrcp.pop %v1100
        %v1179 = vmul.f32 1.0, %v1178
        %v1180 = vrcp.pop %v1101
        %v1181 = vmul.f32 1.0, %v1180
        %v1182 = vrcp.pop %v1102
        %v1183 = vmul.f32 1.0, %v1182
        %v1184 = vrcp.pop %v1103
        %v1185 = vmul.f32 1.0, %v1184
        %v1186 = vrcp.pop %v1104
        %v1187 = vmul.f32 1.0, %v1186
        %v1188 = vrcp.pop %v1105
        %v1189 = vmul.f32 1.0, %v1188
        %v1190 = vrcp.pop %v1106
        %v1191 = vmul.f32 1.0, %v1190
        %v1192 = vrcp.pop %v1107
        %v1193 = vmul.f32 1.0, %v1192
        %v1194 = vrcp.pop %v1108
        %v1195 = vmul.f32 1.0, %v1194
        %v1196 = vrcp.pop %v1109
        %v1197 = vmul.f32 1.0, %v1196
        %v1198 = vrcp.pop %v1110
        %v1199 = vmul.f32 1.0, %v1198
        %v1200 = vrcp.pop %v1111
        %v1201 = vmul.f32 1.0, %v1200
        %v1202 = vrcp.pop %v1112
        %v1203 = vmul.f32 1.0, %v1202
        %v1204 = vrcp.pop %v1113
        %v1205 = vmul.f32 1.0, %v1204
        %v1206 = vrcp.pop %v1114
        %v1207 = vmul.f32 1.0, %v1206
        %v1208 = vrcp.pop %v1115
        %v1209 = vmul.f32 1.0, %v1208
        %v1210 = vrcp.pop %v1116
        %v1211 = vmul.f32 1.0, %v1210
        %v1212 = vrcp.pop %v1117
        %v1213 = vmul.f32 1.0, %v1212
        %v1214 = vmul.f32 %v736, %v1119
        %v1215 = vmul.f32 %v739, %v1121
        %v1216 = vmul.f32 %v744, %v1123
        %v1217 = vmul.f32 %v747, %v1125
        %v1218 = vmul.f32 %v752, %v1127
        %v1219 = vmul.f32 %v755, %v1129
        %v1220 = vmul.f32 %v760, %v1131
        %v1221 = vmul.f32 %v763, %v1133
        %v1222 = vmul.f32 %v768, %v1135
        %v1223 = vmul.f32 %v771, %v1137
        %v1224 = vmul.f32 %v776, %v1139
        %v1225 = vmul.f32 %v779, %v1141
        %v1226 = vmul.f32 %v784, %v1143
        %v1227 = vmul.f32 %v787, %v1145
        %v1228 = vmul.f32 %v792, %v1147
        %v1229 = vmul.f32 %v795, %v1149
        %v1230 = vmul.f32 %v800, %v1151
        %v1231 = vmul.f32 %v803, %v1153
        %v1232 = vmul.f32 %v808, %v1155
        %v1233 = vmul.f32 %v811, %v1157
        %v1234 = vmul.f32 %v816, %v1159
        %v1235 = vmul.f32 %v819, %v1161
        %v1236 = vmul.f32 %v824, %v1163
        %v1237 = vmul.f32 %v827, %v1165
        %v1238 = vmul.f32 %v832, %v1167
        %v1239 = vmul.f32 %v835, %v1169
        %v1240 = vmul.f32 %v840, %v1171
        %v1241 = vmul.f32 %v843, %v1173
        %v1242 = vmul.f32 %v848, %v1175
        %v1243 = vmul.f32 %v851, %v1177
        %v1244 = vmul.f32 %v856, %v1179
        %v1245 = vmul.f32 %v859, %v1181
        %v1246 = vmul.f32 %v864, %v1183
        %v1247 = vmul.f32 %v867, %v1185
        %v1248 = vmul.f32 %v872, %v1187
        %v1249 = vmul.f32 %v875, %v1189
        %v1250 = vmul.f32 %v880, %v1191
        %v1251 = vmul.f32 %v883, %v1193
        %v1252 = vmul.f32 %v888, %v1195
        %v1253 = vmul.f32 %v891, %v1197
        %v1254 = vmul.f32 %v896, %v1199
        %v1255 = vmul.f32 %v899, %v1201
        %v1256 = vmul.f32 %v904, %v1203
        %v1257 = vmul.f32 %v907, %v1205
        %v1258 = vmul.f32 %v912, %v1207
        %v1259 = vmul.f32 %v915, %v1209
        %v1260 = vmul.f32 %v920, %v1211
        %v1261 = vmul.f32 %v923, %v1213
        %v1262 = vld [vmem:[%s427] sm:$0xff]
        %v1263 = vadd.f32 %v1214, %v1215
        %v1264 = vadd.f32 %v1263, %v1216
        %v1265 = vadd.f32 %v1264, %v1217
        %v1266 = vadd.f32 %v1265, %v1218
        %v1267 = vadd.f32 %v1266, %v1219
        %v1268 = vrot.slane %v1267, 4
        %v1269 = vadd.f32 %v1267, %v1268
        %v1270 = vrot.slane %v1269, 2
        %v1271 = vadd.f32 %v1269, %v1270
        %v1272 = vrot.slane %v1271, 1
        %v1273 = vadd.f32 %v1271, %v1272
        %v1274 = vadd.f32 %v1220, %v1221
        %v1275 = vadd.f32 %v1274, %v1222
        %v1276 = vadd.f32 %v1275, %v1223
        %v1277 = vadd.f32 %v1276, %v1224
        %v1278 = vadd.f32 %v1277, %v1225
        %v1279 = vrot.slane %v1278, 4
        %v1280 = vadd.f32 %v1278, %v1279
        %v1281 = vrot.slane %v1280, 2
        %v1282 = vadd.f32 %v1280, %v1281
        %v1283 = vrot.slane %v1282, 1
        %v1284 = vadd.f32 %v1282, %v1283
        %v1285 = vadd.f32 %v1226, %v1227
        %v1286 = vadd.f32 %v1285, %v1228
        %v1287 = vadd.f32 %v1286, %v1229
        %v1288 = vadd.f32 %v1287, %v1230
        %v1289 = vadd.f32 %v1288, %v1231
        %v1290 = vrot.slane %v1289, 4
        %v1291 = vadd.f32 %v1289, %v1290
        %v1292 = vrot.slane %v1291, 2
        %v1293 = vadd.f32 %v1291, %v1292
        %v1294 = vrot.slane %v1293, 1
        %v1295 = vadd.f32 %v1293, %v1294
        %v1296 = vadd.f32 %v1232, %v1233
        %v1297 = vadd.f32 %v1296, %v1234
        %v1298 = vadd.f32 %v1297, %v1235
        %v1299 = vadd.f32 %v1298, %v1236
        %v1300 = vadd.f32 %v1299, %v1237
        %v1301 = vrot.slane %v1300, 4
        %v1302 = vadd.f32 %v1300, %v1301
        %v1303 = vrot.slane %v1302, 2
        %v1304 = vadd.f32 %v1302, %v1303
        %v1305 = vrot.slane %v1304, 1
        %v1306 = vadd.f32 %v1304, %v1305
        %v1307 = vadd.f32 %v1238, %v1239
        %v1308 = vadd.f32 %v1307, %v1240
        %v1309 = vadd.f32 %v1308, %v1241
        %v1310 = vadd.f32 %v1309, %v1242
        %v1311 = vadd.f32 %v1310, %v1243
        %v1312 = vrot.slane %v1311, 4
        %v1313 = vadd.f32 %v1311, %v1312
        %v1314 = vrot.slane %v1313, 2
        %v1315 = vadd.f32 %v1313, %v1314
        %v1316 = vrot.slane %v1315, 1
        %v1317 = vadd.f32 %v1315, %v1316
        %v1318 = vadd.f32 %v1244, %v1245
        %v1319 = vadd.f32 %v1318, %v1246
        %v1320 = vadd.f32 %v1319, %v1247
        %v1321 = vadd.f32 %v1320, %v1248
        %v1322 = vadd.f32 %v1321, %v1249
        %v1323 = vrot.slane %v1322, 4
        %v1324 = vadd.f32 %v1322, %v1323
        %v1325 = vrot.slane %v1324, 2
        %v1326 = vadd.f32 %v1324, %v1325
        %v1327 = vrot.slane %v1326, 1
        %v1328 = vadd.f32 %v1326, %v1327
        %v1329 = vadd.f32 %v1250, %v1251
        %v1330 = vadd.f32 %v1329, %v1252
        %v1331 = vadd.f32 %v1330, %v1253
        %v1332 = vadd.f32 %v1331, %v1254
        %v1333 = vadd.f32 %v1332, %v1255
        %v1334 = vrot.slane %v1333, 4
        %v1335 = vadd.f32 %v1333, %v1334
        %v1336 = vrot.slane %v1335, 2
        %v1337 = vadd.f32 %v1335, %v1336
        %v1338 = vrot.slane %v1337, 1
        %v1339 = vadd.f32 %v1337, %v1338
        %v1340 = vadd.f32 %v1256, %v1257
        %v1341 = vadd.f32 %v1340, %v1258
        %v1342 = vadd.f32 %v1341, %v1259
        %v1343 = vadd.f32 %v1342, %v1260
        %v1344 = vadd.f32 %v1343, %v1261
        %v1345 = vrot.slane %v1344, 4
        %v1346 = vadd.f32 %v1344, %v1345
        %v1347 = vrot.slane %v1346, 2
        %v1348 = vadd.f32 %v1346, %v1347
        %v1349 = vrot.slane %v1348, 1
        %v1350 = vadd.f32 %v1348, %v1349
        %vm1359 = vcmask 1041409
        %v1360 = vsel %vm1359, %v1284, %v1273
        %vm1361 = vcmask 1042434
        %v1362 = vsel %vm1361, %v1295, %v1360
        %vm1363 = vcmask 1043459
        %v1364 = vsel %vm1363, %v1306, %v1362
        %vm1365 = vcmask 1044484
        %v1366 = vsel %vm1365, %v1317, %v1364
        %vm1367 = vcmask 1045509
        %v1368 = vsel %vm1367, %v1328, %v1366
        %vm1369 = vcmask 1046534
        %v1370 = vsel %vm1369, %v1339, %v1368
        %vm1371 = vcmask 1047559
        %v1372 = vsel %vm1371, %v1350, %v1370
        %v1374 = vadd.f32 %v1262, %v1372
        %1375 = vst [vmem:[%s427] sm:$0xff] %v1374
        %s1376 = sand.u32 %s118, 1
        %s1377 = scalar_lea.sflag [#allocation4], %s1376
        %s1378 = sand.u32 %s118, 1
        %s1379 = smul.addr %s1378, 8
        %s1380 = scalar_lea.vmem [#allocation3], %s1379
        // Predicated region
        $region78: #{tpu_custom_call.1} parent=68 // pred_check
          %p1381 = pneg %p128
        $region79: #{tpu_custom_call.1} parent=68 // pred_check_branch
          %1383 = sbr.rel (%p1381) target = $region81
        $region80: #{tpu_custom_call.1} parent=68 // pred_region
          %s1385 = ssub.s32 128, 128
          %1386 = vsyncadd %s1377, %s1385
          %s1387 = sadd.s32 %s22, %s23
          %s1388 = smul.addr %s1387, 128
          %s1389 = scalar_lea.hbm %s3, %s1388
          %s1391 = sshll.u32 %s1380, 4
          %s1392 = int_to_ptr.vmem [resolvable:$true] %s1391
          %1394 = dma.vmem_to_hbm [thread:$0]  %s1392, 128, %s1389, %s1377
        $region81: #{tpu_custom_call.1} parent=68 // pred_fallthru
          _
      $region69: #{tpu_custom_call.1} parent=5 // pred_fallthru
        _
      %p1395 = scmp.le.s32.totalorder 2, %s12
      // Predicated region
      $region82: #{tpu_custom_call.1} parent=5 // pred_check
        %p1396 = pneg %p1395
      $region83: #{tpu_custom_call.1} parent=5 // pred_check_branch
        %1398 = sbr.rel (%p1396) target = $region85
      $region84: #{tpu_custom_call.1} parent=5 // pred_region
        %s1399 = ssub.s32 %s12, 2
        // Predicated region
        $region86: #{tpu_custom_call.1} parent=84 // pred_check
          %p1400 = pneg %p134
        $region87: #{tpu_custom_call.1} parent=84 // pred_check_branch
          %1402 = sbr.rel (%p1400) target = $region89
        $region88: #{tpu_custom_call.1} parent=84 // pred_region
          %s1403 = sand.u32 %s119, 1
          %s1404 = scalar_lea.sflag [#allocation4], %s1403
          %s1405 = sand.u32 %s119, 1
          %s1406 = smul.addr %s1405, 8
          %s1407 = scalar_lea.vmem [#allocation3], %s1406
          %1408 = dma.done %s1404, 128
        $region89: #{tpu_custom_call.1} parent=84 // pred_fallthru
          _
      $region85: #{tpu_custom_call.1} parent=5 // pred_fallthru
        _
    $region6: #{tpu_custom_call.1} parent=1 // loop_footer
      %s16 = sadd.s32 1, %s12
    $region7: #{tpu_custom_call.1} parent=1 // loop_footer_branch
      %11 = sbr.rel target = $region3
    $region8: #{tpu_custom_call.1} parent=1 // loop_exit
      _
    %1409 = vsyncpa [#allocation4], 1
    %s1410 = scalar_lea.sflag [#allocation4], 1
    %1411 = vsyncpa %s1410, 1

</llo_original>
